<compile_context>
chip_gen: v7x
topology: tpu7x:2x2x1
jax: 0.10.0
libtpu: 0.0.40
codegen_flags: <defaults>
</compile_context>

<pallas_src>
import functools
import math

import jax
import jax.numpy as jnp
from jax.experimental import pallas as pl
from jax.experimental.pallas import tpu as pltpu


_DEFAULT_TILE_BYTES = 8 * 1024 * 1024   # ~8 MiB per input tile
_VMEM_LIMIT_BYTES = 48 * 1024 * 1024    # 2 inputs x 2 buffers x 8 MiB + slack (< 64 MiB v7x)


def _round_down(x, m):
    return (x // m) * m


def _round_up(x, m):
    return ((x + m - 1) // m) * m


def _cdiv(a, b):
    return -(-a // b)


def _sublane_multiple(itemsize):
    # Native sublane tile: 8 for f32, 16 for bf16/f16, 32 for int8/fp8.
    return max(8, 32 // int(itemsize))


def _plan_layout(shape, itemsize, target_bytes):
    """Choose a 2-D view (rows, cols) and a tile (tile_m, tile_n).

    Preferred path: flatten to (rows, L) with L a multiple of 128 that divides
    N, then use full-width tiles (tile_n == L) so every tile is one contiguous
    linear DMA with zero lane padding and no column masking.
    Fallback (N not a multiple of 128): keep the trailing dim as the lane dim.
    """
    n_total = math.prod(shape)
    sub = _sublane_multiple(itemsize)

    if n_total % 128 == 0:
        max_l = max(128, _round_down(target_bytes // (sub * itemsize), 128))
        # Prefer >= 2*sub rows so the row-tile grid can split across 2 TCs.
        upper = min(max_l, max(128, _round_down(n_total // (2 * sub), 128)))
        lane = None
        for k in range(upper // 128, 0, -1):
            cand = 128 * k
            if n_total % cand == 0:
                lane = cand
                break
        if lane is not None:
            rows, cols = n_total // lane, lane
            tile_n = cols
            tm = max(sub, _round_down(target_bytes // (tile_n * itemsize), sub))
            tile_m = rows if tm >= rows else tm
            return rows, cols, tile_m, tile_n

    # Fallback: trailing dim as lane dim (may be lane-padded / column-tiled).
    if len(shape) >= 2:
        cols = shape[-1]
        rows = n_total // cols
    else:
        rows, cols = 1, max(n_total, 1)
    if sub * cols * itemsize <= target_bytes:
        tile_n = cols
    else:
        tile_n = max(128, _round_down(target_bytes // (sub * itemsize), 128))
        tile_n = min(tile_n, cols)
    tm = max(sub, _round_down(target_bytes // (tile_n * itemsize), sub))
    tile_m = rows if tm >= rows else tm
    return rows, cols, tile_m, tile_n


def _maybe_even_grid_m(rows, cols, tile_m, tile_n, itemsize):
    """v7x shards 'parallel' grid axes across 2 TensorCores; avoid an odd
    single-axis grid when the input is big enough for imbalance to matter."""
    gm = _cdiv(rows, tile_m)
    gn = _cdiv(cols, tile_n)
    if gn != 1 or gm % 2 == 0:
        return tile_m
    if rows * cols * itemsize < (4 << 20):   # tiny input: extra steps not worth it
        return tile_m
    sub = _sublane_multiple(itemsize)
    cand = min(tile_m, _round_up(_cdiv(rows, gm + 1), sub))
    while cand >= sub:
        if _cdiv(rows, cand) % 2 == 0:
            return cand
        cand -= sub
    return tile_m


def _mse_partial_kernel(pred_ref, tgt_ref, out_ref, *,
                        tile_m, tile_n, rows, cols, mask_rows, mask_cols):
    """One grid step: partial sum of squared differences for this tile.

    pred_ref / tgt_ref : (tile_m, tile_n) VMEM tiles
    out_ref            : (1, 1) f32 SMEM block (this tile's partial sum)
    """
    d = pred_ref[...].astype(jnp.float32) - tgt_ref[...].astype(jnp.float32)
    sq = d * d

    if not (mask_rows or mask_cols):
        out_ref[0, 0] = jnp.sum(sq)
        return

    i = pl.program_id(0)
    j = pl.program_id(1)

    # Only true tail tiles pay for masking; interior tiles take the cheap path.
    tail_conds = []
    if mask_rows:
        tail_conds.append(i == pl.num_programs(0) - 1)
    if mask_cols:
        tail_conds.append(j == pl.num_programs(1) - 1)
    is_tail = tail_conds[0]
    for c in tail_conds[1:]:
        is_tail = jnp.logical_or(is_tail, c)

    @pl.when(jnp.logical_not(is_tail))
    def _():
        out_ref[0, 0] = jnp.sum(sq)

    @pl.when(is_tail)
    def _():
        valid = None
        if mask_rows:
            rr = jax.lax.broadcasted_iota(jnp.int32, (tile_m, 1), 0)
            valid = (rr + i * tile_m) < rows
        if mask_cols:
            cc = jax.lax.broadcasted_iota(jnp.int32, (1, tile_n), 1)
            cmask = (cc + j * tile_n) < cols
            valid = cmask if valid is None else (valid & cmask)
        out_ref[0, 0] = jnp.sum(jnp.where(valid, sq, jnp.float32(0.0)))


def mse_loss(predictions: jax.Array, targets: jax.Array, *,
             target_tile_bytes: int = _DEFAULT_TILE_BYTES) -> jax.Array:
    assert predictions.shape == targets.shape, "shape mismatch"

    n_total = math.prod(predictions.shape)
    if n_total == 0:
        # torch.mean of an empty tensor is NaN.
        return jnp.float32(float("nan"))

    itemsize = jnp.dtype(predictions.dtype).itemsize
    rows, cols, tile_m, tile_n = _plan_layout(predictions.shape, itemsize,
                                              target_tile_bytes)
    tile_m = _maybe_even_grid_m(rows, cols, tile_m, tile_n, itemsize)

    grid_m = _cdiv(rows, tile_m)
    grid_n = _cdiv(cols, tile_n)
    mask_rows = (rows % tile_m) != 0
    mask_cols = (cols % tile_n) != 0

    p2 = predictions.reshape(rows, cols)
    t2 = targets.reshape(rows, cols)

    kernel = functools.partial(
        _mse_partial_kernel,
        tile_m=tile_m, tile_n=tile_n, rows=rows, cols=cols,
        mask_rows=mask_rows, mask_cols=mask_cols)

    partials = pl.pallas_call(
        kernel,
        out_shape=jax.ShapeDtypeStruct((grid_m, grid_n), jnp.float32),
        grid=(grid_m, grid_n),
        in_specs=[
            pl.BlockSpec((tile_m, tile_n), lambda i, j: (i, j)),
            pl.BlockSpec((tile_m, tile_n), lambda i, j: (i, j)),
        ],
        out_specs=pl.BlockSpec((1, 1), lambda i, j: (i, j),
                               memory_space=pltpu.MemorySpace.SMEM),
        compiler_params=pltpu.CompilerParams(
            dimension_semantics=("parallel", "parallel"),
            vmem_limit_bytes=_VMEM_LIMIT_BYTES,
        ),
        cost_estimate=pl.CostEstimate(
            flops=3 * n_total,
            transcendentals=0,
            bytes_accessed=2 * n_total * itemsize + grid_m * grid_n * 4,
        ),
    )(p2, t2)

    # Cross-tile reduce + mean normalization in the wrapper.
    return jnp.sum(partials) * jnp.float32(1.0 / float(n_total))


if __name__ == "__main__":
    key = jax.random.PRNGKey(0)
    k1, k2, k3, k4, k5, k6 = jax.random.split(key, 6)

    # (batch, features) regression inputs, consistent with the module's forward.
    preds = jax.random.normal(k1, (128, 4096), dtype=jnp.float32)
    tgts = jax.random.normal(k2, (128, 4096), dtype=jnp.float32)
    loss = mse_loss(preds, tgts)
    jax.block_until_ready(loss)
    ref = jnp.mean((preds - tgts) ** 2)
    assert jnp.allclose(loss, ref, rtol=1e-4, atol=1e-6), (loss, ref)

    # Awkward (non-divisible) shape with a tiny tile budget: exercises the
    # multi-tile path plus gated tail-row / tail-column masking.
    p2 = jax.random.normal(k3, (100, 272), dtype=jnp.float32)
    t2 = jax.random.normal(k4, (100, 272), dtype=jnp.float32)
    loss2 = mse_loss(p2, t2, target_tile_bytes=8 * 1024)
    jax.block_until_ready(loss2)
    ref2 = jnp.mean((p2 - t2) ** 2)
    assert jnp.allclose(loss2, ref2, rtol=1e-4, atol=1e-6), (loss2, ref2)

    # 1-D input whose length is not a multiple of 128: exercises the fallback
    # layout path.
    p3 = jax.random.normal(k5, (13000,), dtype=jnp.float32)
    t3 = jax.random.normal(k6, (13000,), dtype=jnp.float32)
    loss3 = mse_loss(p3, t3)
    jax.block_until_ready(loss3)
    ref3 = jnp.mean((p3 - t3) ** 2)
    assert jnp.allclose(loss3, ref3, rtol=1e-4, atol=1e-6), (loss3, ref3)

    print("KERNEL_OK")
</pallas_src>

<mosaic_0001>
module attributes {stable_mosaic.version = 11 : i64} {
  func.func @_mse_partial_kernel(%arg0: i32, %arg1: i32, %arg2: memref<16x32768xf32, #tpu.memory_space<vmem>>, %arg3: memref<16x32768xf32, #tpu.memory_space<vmem>>, %arg4: memref<1x1xf32, #tpu.memory_space<smem>>) attributes {dimension_semantics = [#tpu.dimension_semantics<parallel>, #tpu.dimension_semantics<parallel>], iteration_bounds = array<i64: 1, 1>, scalar_prefetch = 0 : i64, scratch_operands = 0 : i64, tpu.core_type = #tpu.core_type<tc>, window_params = [{transform_indices = @transform_0, window_bounds = array<i64: 16, 32768>}, {transform_indices = @transform_1, window_bounds = array<i64: 16, 32768>}, {transform_indices = @transform_2, window_bounds = array<i64: 1, 1>}]} {
    %c0 = arith.constant 0 : index
    %c0_0 = arith.constant 0 : index
    %0 = vector.load %arg2[%c0, %c0_0] : memref<16x32768xf32, #tpu.memory_space<vmem>>, vector<16x32768xf32>
    %c0_1 = arith.constant 0 : index
    %c0_2 = arith.constant 0 : index
    %1 = vector.load %arg3[%c0_1, %c0_2] : memref<16x32768xf32, #tpu.memory_space<vmem>>, vector<16x32768xf32>
    %2 = arith.subf %0, %1 : vector<16x32768xf32>
    %3 = arith.mulf %2, %2 : vector<16x32768xf32>
    %4 = vector.shape_cast %3 : vector<16x32768xf32> to vector<1x16x32768xf32>
    %cst = arith.constant dense<0.000000e+00> : vector<1xf32>
    %5 = vector.multi_reduction <add>, %4, %cst [1, 2] : vector<1x16x32768xf32> to vector<1xf32>
    %6 = vector.shape_cast %5 : vector<1xf32> to vector<1x1x1xf32>
    %7 = vector.extract %6[0, 0, 0] : f32 from vector<1x1x1xf32>
    %c0_3 = arith.constant 0 : index
    %c0_4 = arith.constant 0 : index
    %8 = memref.load %arg4[%c0_3, %c0_4] : memref<1x1xf32, #tpu.memory_space<smem>>
    memref.store %7, %arg4[%c0_3, %c0_4] : memref<1x1xf32, #tpu.memory_space<smem>>
    return
  }
  func.func @transform_0(%arg0: i32, %arg1: i32) -> (i32, i32) {
    %c0_i32 = arith.constant 0 : i32
    return %arg0, %arg1 : i32, i32
  }
  func.func @transform_1(%arg0: i32, %arg1: i32) -> (i32, i32) {
    %c0_i32 = arith.constant 0 : i32
    return %arg0, %arg1 : i32, i32
  }
  func.func @transform_2(%arg0: i32, %arg1: i32) -> (i32, i32) {
    %c0_i32 = arith.constant 0 : i32
    return %arg0, %arg1 : i32, i32
  }
}

</mosaic_0001>

<llo_original>
// kernel: tpu_custom_call.1
$region0: #{tpu_custom_call.1}
  #allocation0 [shape = 'u32[]', space=smem, size = 0x4, offset = 0x4, fixed_abs, tag = 'smem constant byte address 0x4 - core index']
  #allocation1 [shape = 'u32[144,128]{1,0:T(1,128)}', space=vmem, size = 0x12000, scoped, tag = 'internal scratch']
  %s0 = inlined_call_operand.hbm [shape: f32[16,32768], index: 0, kind: input, shape index: {}]
  %s1 = inlined_call_operand.hbm [shape: f32[16,32768], index: 1, kind: input, shape index: {}]
  %s2 = inlined_call_operand.hbm [shape: f32[1,1], index: 2, kind: output, shape index: {}]
  %s3 = sld [smem:[#allocation0]]
  $region26: #{tpu_custom_call.1} parent=0
    _
  %s5 = ssub.s32 1, %s3
  %s6 = scalar_select 0, %s5, %s3
  $region1: #{tpu_custom_call.1} parent=0
    #allocation2 [shape = 'u8[2097152]{0}', space=vmem, size = 0x200000, scoped, tag = 'input window, operand 0, single buffered']
    #allocation3 [shape = 's32[1]{0}', space=sflag, size = 0x4, scoped, tag = 'scoped memory for tpu_custom_call.1']
    #allocation4 [shape = 's32[1]{0}', space=sflag, size = 0x4, scoped, tag = 'scoped memory for tpu_custom_call.1']
    #allocation5 [shape = 'u8[2097152]{0}', space=vmem, size = 0x200000, scoped, tag = 'input window, operand 1, single buffered']
    #allocation6 [shape = 's32[1]{0}', space=sflag, size = 0x4, scoped, tag = 'scoped memory for tpu_custom_call.1']
    #allocation7 [shape = 'u8[512]{0}', space=smem, size = 0x200, scoped, tag = 'output window, operand 0, single buffered']
    %7 = vsyncpa [#allocation3], 0
    %8 = vsyncpa [#allocation6], 0
    %9 = vsyncpa [#allocation4], 0
    // Predicated region
    $region2: #{tpu_custom_call.1} parent=1 // pred_check
      _
    $region3: #{tpu_custom_call.1} parent=1 // pred_check_branch
      %11 = sbr.rel (0) target = $region5
    $region4: #{tpu_custom_call.1} parent=1 // pred_region
      %s13 = ssub.s32 65536, 65536
      %14 = vsyncadd [#allocation3], %s13
      %s15 = sshll.u32 [#allocation2], 4
      %s16 = int_to_ptr.vmem [resolvable:$true] %s15
      %21 = dma.hbm_to_vmem [thread:$0]  %s0, 65536, %s16, [#allocation3], 32768, 32768, 2048
    $region5: #{tpu_custom_call.1} parent=1 // pred_fallthru
      _
    // Predicated region
    $region6: #{tpu_custom_call.1} parent=1 // pred_check
      _
    $region7: #{tpu_custom_call.1} parent=1 // pred_check_branch
      %23 = sbr.rel (0) target = $region9
    $region8: #{tpu_custom_call.1} parent=1 // pred_region
      %s25 = ssub.s32 65536, 65536
      %26 = vsyncadd [#allocation6], %s25
      %s27 = sshll.u32 [#allocation5], 4
      %s28 = int_to_ptr.vmem [resolvable:$true] %s27
      %33 = dma.hbm_to_vmem [thread:$0]  %s1, 65536, %s28, [#allocation6], 32768, 32768, 2048
    $region9: #{tpu_custom_call.1} parent=1 // pred_fallthru
      _
    // Predicated region
    $region10: #{tpu_custom_call.1} parent=1 // pred_check
      _
    $region11: #{tpu_custom_call.1} parent=1 // pred_check_branch
      %35 = sbr.rel (0) target = $region13
    $region12: #{tpu_custom_call.1} parent=1 // pred_region
      %36 = dma.done [#allocation3], 65536
    $region13: #{tpu_custom_call.1} parent=1 // pred_fallthru
      _
    // Predicated region
    $region14: #{tpu_custom_call.1} parent=1 // pred_check
      _
    $region15: #{tpu_custom_call.1} parent=1 // pred_check_branch
      %38 = sbr.rel (0) target = $region17
    $region16: #{tpu_custom_call.1} parent=1 // pred_region
      %39 = dma.done [#allocation6], 65536
    $region17: #{tpu_custom_call.1} parent=1 // pred_fallthru
      _
    %v40 = vld [vmem:[#allocation2] sm:$0xff]
    %v41 = vld [vmem:[#allocation2 + $0x8] sm:$0xff]
    %v42 = vld [vmem:[#allocation2 + $0x10] sm:$0xff]
    %v43 = vld [vmem:[#allocation2 + $0x18] sm:$0xff]
    %v44 = vld [vmem:[#allocation2 + $0x20] sm:$0xff]
    %v45 = vld [vmem:[#allocation2 + $0x28] sm:$0xff]
    %v46 = vld [vmem:[#allocation2 + $0x30] sm:$0xff]
    %v47 = vld [vmem:[#allocation2 + $0x38] sm:$0xff]
    %v48 = vld [vmem:[#allocation2 + $0x40] sm:$0xff]
    %v49 = vld [vmem:[#allocation2 + $0x48] sm:$0xff]
    %v50 = vld [vmem:[#allocation2 + $0x50] sm:$0xff]
    %v51 = vld [vmem:[#allocation2 + $0x58] sm:$0xff]
    %v52 = vld [vmem:[#allocation2 + $0x60] sm:$0xff]
    %v53 = vld [vmem:[#allocation2 + $0x68] sm:$0xff]
    %v54 = vld [vmem:[#allocation2 + $0x70] sm:$0xff]
    %v55 = vld [vmem:[#allocation2 + $0x78] sm:$0xff]
    %v56 = vld [vmem:[#allocation2 + $0x80] sm:$0xff]
    %v57 = vld [vmem:[#allocation2 + $0x88] sm:$0xff]
    %v58 = vld [vmem:[#allocation2 + $0x90] sm:$0xff]
    %v59 = vld [vmem:[#allocation2 + $0x98] sm:$0xff]
    %v60 = vld [vmem:[#allocation2 + $0xa0] sm:$0xff]
    %v61 = vld [vmem:[#allocation2 + $0xa8] sm:$0xff]
    %v62 = vld [vmem:[#allocation2 + $0xb0] sm:$0xff]
    %v63 = vld [vmem:[#allocation2 + $0xb8] sm:$0xff]
    %v64 = vld [vmem:[#allocation2 + $0xc0] sm:$0xff]
    %v65 = vld [vmem:[#allocation2 + $0xc8] sm:$0xff]
    %v66 = vld [vmem:[#allocation2 + $0xd0] sm:$0xff]
    %v67 = vld [vmem:[#allocation2 + $0xd8] sm:$0xff]
    %v68 = vld [vmem:[#allocation2 + $0xe0] sm:$0xff]
    %v69 = vld [vmem:[#allocation2 + $0xe8] sm:$0xff]
    %v70 = vld [vmem:[#allocation2 + $0xf0] sm:$0xff]
    %v71 = vld [vmem:[#allocation2 + $0xf8] sm:$0xff]
    %v72 = vld [vmem:[#allocation2 + $0x100] sm:$0xff]
    %v73 = vld [vmem:[#allocation2 + $0x108] sm:$0xff]
    %v74 = vld [vmem:[#allocation2 + $0x110] sm:$0xff]
    %v75 = vld [vmem:[#allocation2 + $0x118] sm:$0xff]
    %v76 = vld [vmem:[#allocation2 + $0x120] sm:$0xff]
    %v77 = vld [vmem:[#allocation2 + $0x128] sm:$0xff]
    %v78 = vld [vmem:[#allocation2 + $0x130] sm:$0xff]
    %v79 = vld [vmem:[#allocation2 + $0x138] sm:$0xff]
    %v80 = vld [vmem:[#allocation2 + $0x140] sm:$0xff]
    %v81 = vld [vmem:[#allocation2 + $0x148] sm:$0xff]
    %v82 = vld [vmem:[#allocation2 + $0x150] sm:$0xff]
    %v83 = vld [vmem:[#allocation2 + $0x158] sm:$0xff]
    %v84 = vld [vmem:[#allocation2 + $0x160] sm:$0xff]
    %v85 = vld [vmem:[#allocation2 + $0x168] sm:$0xff]
    %v86 = vld [vmem:[#allocation2 + $0x170] sm:$0xff]
    %v87 = vld [vmem:[#allocation2 + $0x178] sm:$0xff]
    %v88 = vld [vmem:[#allocation2 + $0x180] sm:$0xff]
    %v89 = vld [vmem:[#allocation2 + $0x188] sm:$0xff]
    %v90 = vld [vmem:[#allocation2 + $0x190] sm:$0xff]
    %v91 = vld [vmem:[#allocation2 + $0x198] sm:$0xff]
    %v92 = vld [vmem:[#allocation2 + $0x1a0] sm:$0xff]
    %v93 = vld [vmem:[#allocation2 + $0x1a8] sm:$0xff]
    %v94 = vld [vmem:[#allocation2 + $0x1b0] sm:$0xff]
    %v95 = vld [vmem:[#allocation2 + $0x1b8] sm:$0xff]
    %v96 = vld [vmem:[#allocation2 + $0x1c0] sm:$0xff]
    %v97 = vld [vmem:[#allocation2 + $0x1c8] sm:$0xff]
    %v98 = vld [vmem:[#allocation2 + $0x1d0] sm:$0xff]
    %v99 = vld [vmem:[#allocation2 + $0x1d8] sm:$0xff]
    %v100 = vld [vmem:[#allocation2 + $0x1e0] sm:$0xff]
    %v101 = vld [vmem:[#allocation2 + $0x1e8] sm:$0xff]
    %v102 = vld [vmem:[#allocation2 + $0x1f0] sm:$0xff]
    %v103 = vld [vmem:[#allocation2 + $0x1f8] sm:$0xff]
    %v104 = vld [vmem:[#allocation2 + $0x200] sm:$0xff]
    %v105 = vld [vmem:[#allocation2 + $0x208] sm:$0xff]
    %v106 = vld [vmem:[#allocation2 + $0x210] sm:$0xff]
    %v107 = vld [vmem:[#allocation2 + $0x218] sm:$0xff]
    %v108 = vld [vmem:[#allocation2 + $0x220] sm:$0xff]
    %v109 = vld [vmem:[#allocation2 + $0x228] sm:$0xff]
    %v110 = vld [vmem:[#allocation2 + $0x230] sm:$0xff]
    %v111 = vld [vmem:[#allocation2 + $0x238] sm:$0xff]
    %v112 = vld [vmem:[#allocation2 + $0x240] sm:$0xff]
    %v113 = vld [vmem:[#allocation2 + $0x248] sm:$0xff]
    %v114 = vld [vmem:[#allocation2 + $0x250] sm:$0xff]
    %v115 = vld [vmem:[#allocation2 + $0x258] sm:$0xff]
    %v116 = vld [vmem:[#allocation2 + $0x260] sm:$0xff]
    %v117 = vld [vmem:[#allocation2 + $0x268] sm:$0xff]
    %v118 = vld [vmem:[#allocation2 + $0x270] sm:$0xff]
    %v119 = vld [vmem:[#allocation2 + $0x278] sm:$0xff]
    %v120 = vld [vmem:[#allocation2 + $0x280] sm:$0xff]
    %v121 = vld [vmem:[#allocation2 + $0x288] sm:$0xff]
    %v122 = vld [vmem:[#allocation2 + $0x290] sm:$0xff]
    %v123 = vld [vmem:[#allocation2 + $0x298] sm:$0xff]
    %v124 = vld [vmem:[#allocation2 + $0x2a0] sm:$0xff]
    %v125 = vld [vmem:[#allocation2 + $0x2a8] sm:$0xff]
    %v126 = vld [vmem:[#allocation2 + $0x2b0] sm:$0xff]
    %v127 = vld [vmem:[#allocation2 + $0x2b8] sm:$0xff]
    %v128 = vld [vmem:[#allocation2 + $0x2c0] sm:$0xff]
    %v129 = vld [vmem:[#allocation2 + $0x2c8] sm:$0xff]
    %v130 = vld [vmem:[#allocation2 + $0x2d0] sm:$0xff]
    %v131 = vld [vmem:[#allocation2 + $0x2d8] sm:$0xff]
    %v132 = vld [vmem:[#allocation2 + $0x2e0] sm:$0xff]
    %v133 = vld [vmem:[#allocation2 + $0x2e8] sm:$0xff]
    %v134 = vld [vmem:[#allocation2 + $0x2f0] sm:$0xff]
    %v135 = vld [vmem:[#allocation2 + $0x2f8] sm:$0xff]
    %v136 = vld [vmem:[#allocation2 + $0x300] sm:$0xff]
    %v137 = vld [vmem:[#allocation2 + $0x308] sm:$0xff]
    %v138 = vld [vmem:[#allocation2 + $0x310] sm:$0xff]
    %v139 = vld [vmem:[#allocation2 + $0x318] sm:$0xff]
    %v140 = vld [vmem:[#allocation2 + $0x320] sm:$0xff]
    %v141 = vld [vmem:[#allocation2 + $0x328] sm:$0xff]
    %v142 = vld [vmem:[#allocation2 + $0x330] sm:$0xff]
    %v143 = vld [vmem:[#allocation2 + $0x338] sm:$0xff]
    %v144 = vld [vmem:[#allocation2 + $0x340] sm:$0xff]
    %v145 = vld [vmem:[#allocation2 + $0x348] sm:$0xff]
    %v146 = vld [vmem:[#allocation2 + $0x350] sm:$0xff]
    %v147 = vld [vmem:[#allocation2 + $0x358] sm:$0xff]
    %v148 = vld [vmem:[#allocation2 + $0x360] sm:$0xff]
    %v149 = vld [vmem:[#allocation2 + $0x368] sm:$0xff]
    %v150 = vld [vmem:[#allocation2 + $0x370] sm:$0xff]
    %v151 = vld [vmem:[#allocation2 + $0x378] sm:$0xff]
    %v152 = vld [vmem:[#allocation2 + $0x380] sm:$0xff]
    %v153 = vld [vmem:[#allocation2 + $0x388] sm:$0xff]
    %v154 = vld [vmem:[#allocation2 + $0x390] sm:$0xff]
    %v155 = vld [vmem:[#allocation2 + $0x398] sm:$0xff]
    %v156 = vld [vmem:[#allocation2 + $0x3a0] sm:$0xff]
    %v157 = vld [vmem:[#allocation2 + $0x3a8] sm:$0xff]
    %v158 = vld [vmem:[#allocation2 + $0x3b0] sm:$0xff]
    %v159 = vld [vmem:[#allocation2 + $0x3b8] sm:$0xff]
    %v160 = vld [vmem:[#allocation2 + $0x3c0] sm:$0xff]
    %v161 = vld [vmem:[#allocation2 + $0x3c8] sm:$0xff]
    %v162 = vld [vmem:[#allocation2 + $0x3d0] sm:$0xff]
    %v163 = vld [vmem:[#allocation2 + $0x3d8] sm:$0xff]
    %v164 = vld [vmem:[#allocation2 + $0x3e0] sm:$0xff]
    %v165 = vld [vmem:[#allocation2 + $0x3e8] sm:$0xff]
    %v166 = vld [vmem:[#allocation2 + $0x3f0] sm:$0xff]
    %v167 = vld [vmem:[#allocation2 + $0x3f8] sm:$0xff]
    %v168 = vld [vmem:[#allocation2 + $0x400] sm:$0xff]
    %v169 = vld [vmem:[#allocation2 + $0x408] sm:$0xff]
    %v170 = vld [vmem:[#allocation2 + $0x410] sm:$0xff]
    %v171 = vld [vmem:[#allocation2 + $0x418] sm:$0xff]
    %v172 = vld [vmem:[#allocation2 + $0x420] sm:$0xff]
    %v173 = vld [vmem:[#allocation2 + $0x428] sm:$0xff]
    %v174 = vld [vmem:[#allocation2 + $0x430] sm:$0xff]
    %v175 = vld [vmem:[#allocation2 + $0x438] sm:$0xff]
    %v176 = vld [vmem:[#allocation2 + $0x440] sm:$0xff]
    %v177 = vld [vmem:[#allocation2 + $0x448] sm:$0xff]
    %v178 = vld [vmem:[#allocation2 + $0x450] sm:$0xff]
    %v179 = vld [vmem:[#allocation2 + $0x458] sm:$0xff]
    %v180 = vld [vmem:[#allocation2 + $0x460] sm:$0xff]
    %v181 = vld [vmem:[#allocation2 + $0x468] sm:$0xff]
    %v182 = vld [vmem:[#allocation2 + $0x470] sm:$0xff]
    %v183 = vld [vmem:[#allocation2 + $0x478] sm:$0xff]
    %v184 = vld [vmem:[#allocation2 + $0x480] sm:$0xff]
    %v185 = vld [vmem:[#allocation2 + $0x488] sm:$0xff]
    %v186 = vld [vmem:[#allocation2 + $0x490] sm:$0xff]
    %v187 = vld [vmem:[#allocation2 + $0x498] sm:$0xff]
    %v188 = vld [vmem:[#allocation2 + $0x4a0] sm:$0xff]
    %v189 = vld [vmem:[#allocation2 + $0x4a8] sm:$0xff]
    %v190 = vld [vmem:[#allocation2 + $0x4b0] sm:$0xff]
    %v191 = vld [vmem:[#allocation2 + $0x4b8] sm:$0xff]
    %v192 = vld [vmem:[#allocation2 + $0x4c0] sm:$0xff]
    %v193 = vld [vmem:[#allocation2 + $0x4c8] sm:$0xff]
    %v194 = vld [vmem:[#allocation2 + $0x4d0] sm:$0xff]
    %v195 = vld [vmem:[#allocation2 + $0x4d8] sm:$0xff]
    %v196 = vld [vmem:[#allocation2 + $0x4e0] sm:$0xff]
    %v197 = vld [vmem:[#allocation2 + $0x4e8] sm:$0xff]
    %v198 = vld [vmem:[#allocation2 + $0x4f0] sm:$0xff]
    %v199 = vld [vmem:[#allocation2 + $0x4f8] sm:$0xff]
    %v200 = vld [vmem:[#allocation2 + $0x500] sm:$0xff]
    %v201 = vld [vmem:[#allocation2 + $0x508] sm:$0xff]
    %v202 = vld [vmem:[#allocation2 + $0x510] sm:$0xff]
    %v203 = vld [vmem:[#allocation2 + $0x518] sm:$0xff]
    %v204 = vld [vmem:[#allocation2 + $0x520] sm:$0xff]
    %v205 = vld [vmem:[#allocation2 + $0x528] sm:$0xff]
    %v206 = vld [vmem:[#allocation2 + $0x530] sm:$0xff]
    %v207 = vld [vmem:[#allocation2 + $0x538] sm:$0xff]
    %v208 = vld [vmem:[#allocation2 + $0x540] sm:$0xff]
    %v209 = vld [vmem:[#allocation2 + $0x548] sm:$0xff]
    %v210 = vld [vmem:[#allocation2 + $0x550] sm:$0xff]
    %v211 = vld [vmem:[#allocation2 + $0x558] sm:$0xff]
    %v212 = vld [vmem:[#allocation2 + $0x560] sm:$0xff]
    %v213 = vld [vmem:[#allocation2 + $0x568] sm:$0xff]
    %v214 = vld [vmem:[#allocation2 + $0x570] sm:$0xff]
    %v215 = vld [vmem:[#allocation2 + $0x578] sm:$0xff]
    %v216 = vld [vmem:[#allocation2 + $0x580] sm:$0xff]
    %v217 = vld [vmem:[#allocation2 + $0x588] sm:$0xff]
    %v218 = vld [vmem:[#allocation2 + $0x590] sm:$0xff]
    %v219 = vld [vmem:[#allocation2 + $0x598] sm:$0xff]
    %v220 = vld [vmem:[#allocation2 + $0x5a0] sm:$0xff]
    %v221 = vld [vmem:[#allocation2 + $0x5a8] sm:$0xff]
    %v222 = vld [vmem:[#allocation2 + $0x5b0] sm:$0xff]
    %v223 = vld [vmem:[#allocation2 + $0x5b8] sm:$0xff]
    %v224 = vld [vmem:[#allocation2 + $0x5c0] sm:$0xff]
    %v225 = vld [vmem:[#allocation2 + $0x5c8] sm:$0xff]
    %v226 = vld [vmem:[#allocation2 + $0x5d0] sm:$0xff]
    %v227 = vld [vmem:[#allocation2 + $0x5d8] sm:$0xff]
    %v228 = vld [vmem:[#allocation2 + $0x5e0] sm:$0xff]
    %v229 = vld [vmem:[#allocation2 + $0x5e8] sm:$0xff]
    %v230 = vld [vmem:[#allocation2 + $0x5f0] sm:$0xff]
    %v231 = vld [vmem:[#allocation2 + $0x5f8] sm:$0xff]
    %v232 = vld [vmem:[#allocation2 + $0x600] sm:$0xff]
    %v233 = vld [vmem:[#allocation2 + $0x608] sm:$0xff]
    %v234 = vld [vmem:[#allocation2 + $0x610] sm:$0xff]
    %v235 = vld [vmem:[#allocation2 + $0x618] sm:$0xff]
    %v236 = vld [vmem:[#allocation2 + $0x620] sm:$0xff]
    %v237 = vld [vmem:[#allocation2 + $0x628] sm:$0xff]
    %v238 = vld [vmem:[#allocation2 + $0x630] sm:$0xff]
    %v239 = vld [vmem:[#allocation2 + $0x638] sm:$0xff]
    %v240 = vld [vmem:[#allocation2 + $0x640] sm:$0xff]
    %v241 = vld [vmem:[#allocation2 + $0x648] sm:$0xff]
    %v242 = vld [vmem:[#allocation2 + $0x650] sm:$0xff]
    %v243 = vld [vmem:[#allocation2 + $0x658] sm:$0xff]
    %v244 = vld [vmem:[#allocation2 + $0x660] sm:$0xff]
    %v245 = vld [vmem:[#allocation2 + $0x668] sm:$0xff]
    %v246 = vld [vmem:[#allocation2 + $0x670] sm:$0xff]
    %v247 = vld [vmem:[#allocation2 + $0x678] sm:$0xff]
    %v248 = vld [vmem:[#allocation2 + $0x680] sm:$0xff]
    %v249 = vld [vmem:[#allocation2 + $0x688] sm:$0xff]
    %v250 = vld [vmem:[#allocation2 + $0x690] sm:$0xff]
    %v251 = vld [vmem:[#allocation2 + $0x698] sm:$0xff]
    %v252 = vld [vmem:[#allocation2 + $0x6a0] sm:$0xff]
    %v253 = vld [vmem:[#allocation2 + $0x6a8] sm:$0xff]
    %v254 = vld [vmem:[#allocation2 + $0x6b0] sm:$0xff]
    %v255 = vld [vmem:[#allocation2 + $0x6b8] sm:$0xff]
    %v256 = vld [vmem:[#allocation2 + $0x6c0] sm:$0xff]
    %v257 = vld [vmem:[#allocation2 + $0x6c8] sm:$0xff]
    %v258 = vld [vmem:[#allocation2 + $0x6d0] sm:$0xff]
    %v259 = vld [vmem:[#allocation2 + $0x6d8] sm:$0xff]
    %v260 = vld [vmem:[#allocation2 + $0x6e0] sm:$0xff]
    %v261 = vld [vmem:[#allocation2 + $0x6e8] sm:$0xff]
    %v262 = vld [vmem:[#allocation2 + $0x6f0] sm:$0xff]
    %v263 = vld [vmem:[#allocation2 + $0x6f8] sm:$0xff]
    %v264 = vld [vmem:[#allocation2 + $0x700] sm:$0xff]
    %v265 = vld [vmem:[#allocation2 + $0x708] sm:$0xff]
    %v266 = vld [vmem:[#allocation2 + $0x710] sm:$0xff]
    %v267 = vld [vmem:[#allocation2 + $0x718] sm:$0xff]
    %v268 = vld [vmem:[#allocation2 + $0x720] sm:$0xff]
    %v269 = vld [vmem:[#allocation2 + $0x728] sm:$0xff]
    %v270 = vld [vmem:[#allocation2 + $0x730] sm:$0xff]
    %v271 = vld [vmem:[#allocation2 + $0x738] sm:$0xff]
    %v272 = vld [vmem:[#allocation2 + $0x740] sm:$0xff]
    %v273 = vld [vmem:[#allocation2 + $0x748] sm:$0xff]
    %v274 = vld [vmem:[#allocation2 + $0x750] sm:$0xff]
    %v275 = vld [vmem:[#allocation2 + $0x758] sm:$0xff]
    %v276 = vld [vmem:[#allocation2 + $0x760] sm:$0xff]
    %v277 = vld [vmem:[#allocation2 + $0x768] sm:$0xff]
    %v278 = vld [vmem:[#allocation2 + $0x770] sm:$0xff]
    %v279 = vld [vmem:[#allocation2 + $0x778] sm:$0xff]
    %v280 = vld [vmem:[#allocation2 + $0x780] sm:$0xff]
    %v281 = vld [vmem:[#allocation2 + $0x788] sm:$0xff]
    %v282 = vld [vmem:[#allocation2 + $0x790] sm:$0xff]
    %v283 = vld [vmem:[#allocation2 + $0x798] sm:$0xff]
    %v284 = vld [vmem:[#allocation2 + $0x7a0] sm:$0xff]
    %v285 = vld [vmem:[#allocation2 + $0x7a8] sm:$0xff]
    %v286 = vld [vmem:[#allocation2 + $0x7b0] sm:$0xff]
    %v287 = vld [vmem:[#allocation2 + $0x7b8] sm:$0xff]
    %v288 = vld [vmem:[#allocation2 + $0x7c0] sm:$0xff]
    %v289 = vld [vmem:[#allocation2 + $0x7c8] sm:$0xff]
    %v290 = vld [vmem:[#allocation2 + $0x7d0] sm:$0xff]
    %v291 = vld [vmem:[#allocation2 + $0x7d8] sm:$0xff]
    %v292 = vld [vmem:[#allocation2 + $0x7e0] sm:$0xff]
    %v293 = vld [vmem:[#allocation2 + $0x7e8] sm:$0xff]
    %v294 = vld [vmem:[#allocation2 + $0x7f0] sm:$0xff]
    %v295 = vld [vmem:[#allocation2 + $0x7f8] sm:$0xff]
    %v296 = vld [vmem:[#allocation2 + $0x800] sm:$0xff]
    %v297 = vld [vmem:[#allocation2 + $0x808] sm:$0xff]
    %v298 = vld [vmem:[#allocation2 + $0x810] sm:$0xff]
    %v299 = vld [vmem:[#allocation2 + $0x818] sm:$0xff]
    %v300 = vld [vmem:[#allocation2 + $0x820] sm:$0xff]
    %v301 = vld [vmem:[#allocation2 + $0x828] sm:$0xff]
    %v302 = vld [vmem:[#allocation2 + $0x830] sm:$0xff]
    %v303 = vld [vmem:[#allocation2 + $0x838] sm:$0xff]
    %v304 = vld [vmem:[#allocation2 + $0x840] sm:$0xff]
    %v305 = vld [vmem:[#allocation2 + $0x848] sm:$0xff]
    %v306 = vld [vmem:[#allocation2 + $0x850] sm:$0xff]
    %v307 = vld [vmem:[#allocation2 + $0x858] sm:$0xff]
    %v308 = vld [vmem:[#allocation2 + $0x860] sm:$0xff]
    %v309 = vld [vmem:[#allocation2 + $0x868] sm:$0xff]
    %v310 = vld [vmem:[#allocation2 + $0x870] sm:$0xff]
    %v311 = vld [vmem:[#allocation2 + $0x878] sm:$0xff]
    %v312 = vld [vmem:[#allocation2 + $0x880] sm:$0xff]
    %v313 = vld [vmem:[#allocation2 + $0x888] sm:$0xff]
    %v314 = vld [vmem:[#allocation2 + $0x890] sm:$0xff]
    %v315 = vld [vmem:[#allocation2 + $0x898] sm:$0xff]
    %v316 = vld [vmem:[#allocation2 + $0x8a0] sm:$0xff]
    %v317 = vld [vmem:[#allocation2 + $0x8a8] sm:$0xff]
    %v318 = vld [vmem:[#allocation2 + $0x8b0] sm:$0xff]
    %v319 = vld [vmem:[#allocation2 + $0x8b8] sm:$0xff]
    %v320 = vld [vmem:[#allocation2 + $0x8c0] sm:$0xff]
    %v321 = vld [vmem:[#allocation2 + $0x8c8] sm:$0xff]
    %v322 = vld [vmem:[#allocation2 + $0x8d0] sm:$0xff]
    %v323 = vld [vmem:[#allocation2 + $0x8d8] sm:$0xff]
    %v324 = vld [vmem:[#allocation2 + $0x8e0] sm:$0xff]
    %v325 = vld [vmem:[#allocation2 + $0x8e8] sm:$0xff]
    %v326 = vld [vmem:[#allocation2 + $0x8f0] sm:$0xff]
    %v327 = vld [vmem:[#allocation2 + $0x8f8] sm:$0xff]
    %v328 = vld [vmem:[#allocation2 + $0x900] sm:$0xff]
    %v329 = vld [vmem:[#allocation2 + $0x908] sm:$0xff]
    %v330 = vld [vmem:[#allocation2 + $0x910] sm:$0xff]
    %v331 = vld [vmem:[#allocation2 + $0x918] sm:$0xff]
    %v332 = vld [vmem:[#allocation2 + $0x920] sm:$0xff]
    %v333 = vld [vmem:[#allocation2 + $0x928] sm:$0xff]
    %v334 = vld [vmem:[#allocation2 + $0x930] sm:$0xff]
    %v335 = vld [vmem:[#allocation2 + $0x938] sm:$0xff]
    %v336 = vld [vmem:[#allocation2 + $0x940] sm:$0xff]
    %v337 = vld [vmem:[#allocation2 + $0x948] sm:$0xff]
    %v338 = vld [vmem:[#allocation2 + $0x950] sm:$0xff]
    %v339 = vld [vmem:[#allocation2 + $0x958] sm:$0xff]
    %v340 = vld [vmem:[#allocation2 + $0x960] sm:$0xff]
    %v341 = vld [vmem:[#allocation2 + $0x968] sm:$0xff]
    %v342 = vld [vmem:[#allocation2 + $0x970] sm:$0xff]
    %v343 = vld [vmem:[#allocation2 + $0x978] sm:$0xff]
    %v344 = vld [vmem:[#allocation2 + $0x980] sm:$0xff]
    %v345 = vld [vmem:[#allocation2 + $0x988] sm:$0xff]
    %v346 = vld [vmem:[#allocation2 + $0x990] sm:$0xff]
    %v347 = vld [vmem:[#allocation2 + $0x998] sm:$0xff]
    %v348 = vld [vmem:[#allocation2 + $0x9a0] sm:$0xff]
    %v349 = vld [vmem:[#allocation2 + $0x9a8] sm:$0xff]
    %v350 = vld [vmem:[#allocation2 + $0x9b0] sm:$0xff]
    %v351 = vld [vmem:[#allocation2 + $0x9b8] sm:$0xff]
    %v352 = vld [vmem:[#allocation2 + $0x9c0] sm:$0xff]
    %v353 = vld [vmem:[#allocation2 + $0x9c8] sm:$0xff]
    %v354 = vld [vmem:[#allocation2 + $0x9d0] sm:$0xff]
    %v355 = vld [vmem:[#allocation2 + $0x9d8] sm:$0xff]
    %v356 = vld [vmem:[#allocation2 + $0x9e0] sm:$0xff]
    %v357 = vld [vmem:[#allocation2 + $0x9e8] sm:$0xff]
    %v358 = vld [vmem:[#allocation2 + $0x9f0] sm:$0xff]
    %v359 = vld [vmem:[#allocation2 + $0x9f8] sm:$0xff]
    %v360 = vld [vmem:[#allocation2 + $0xa00] sm:$0xff]
    %v361 = vld [vmem:[#allocation2 + $0xa08] sm:$0xff]
    %v362 = vld [vmem:[#allocation2 + $0xa10] sm:$0xff]
    %v363 = vld [vmem:[#allocation2 + $0xa18] sm:$0xff]
    %v364 = vld [vmem:[#allocation2 + $0xa20] sm:$0xff]
    %v365 = vld [vmem:[#allocation2 + $0xa28] sm:$0xff]
    %v366 = vld [vmem:[#allocation2 + $0xa30] sm:$0xff]
    %v367 = vld [vmem:[#allocation2 + $0xa38] sm:$0xff]
    %v368 = vld [vmem:[#allocation2 + $0xa40] sm:$0xff]
    %v369 = vld [vmem:[#allocation2 + $0xa48] sm:$0xff]
    %v370 = vld [vmem:[#allocation2 + $0xa50] sm:$0xff]
    %v371 = vld [vmem:[#allocation2 + $0xa58] sm:$0xff]
    %v372 = vld [vmem:[#allocation2 + $0xa60] sm:$0xff]
    %v373 = vld [vmem:[#allocation2 + $0xa68] sm:$0xff]
    %v374 = vld [vmem:[#allocation2 + $0xa70] sm:$0xff]
    %v375 = vld [vmem:[#allocation2 + $0xa78] sm:$0xff]
    %v376 = vld [vmem:[#allocation2 + $0xa80] sm:$0xff]
    %v377 = vld [vmem:[#allocation2 + $0xa88] sm:$0xff]
    %v378 = vld [vmem:[#allocation2 + $0xa90] sm:$0xff]
    %v379 = vld [vmem:[#allocation2 + $0xa98] sm:$0xff]
    %v380 = vld [vmem:[#allocation2 + $0xaa0] sm:$0xff]
    %v381 = vld [vmem:[#allocation2 + $0xaa8] sm:$0xff]
    %v382 = vld [vmem:[#allocation2 + $0xab0] sm:$0xff]
    %v383 = vld [vmem:[#allocation2 + $0xab8] sm:$0xff]
    %v384 = vld [vmem:[#allocation2 + $0xac0] sm:$0xff]
    %v385 = vld [vmem:[#allocation2 + $0xac8] sm:$0xff]
    %v386 = vld [vmem:[#allocation2 + $0xad0] sm:$0xff]
    %v387 = vld [vmem:[#allocation2 + $0xad8] sm:$0xff]
    %v388 = vld [vmem:[#allocation2 + $0xae0] sm:$0xff]
    %v389 = vld [vmem:[#allocation2 + $0xae8] sm:$0xff]
    %v390 = vld [vmem:[#allocation2 + $0xaf0] sm:$0xff]
    %v391 = vld [vmem:[#allocation2 + $0xaf8] sm:$0xff]
    %v392 = vld [vmem:[#allocation2 + $0xb00] sm:$0xff]
    %v393 = vld [vmem:[#allocation2 + $0xb08] sm:$0xff]
    %v394 = vld [vmem:[#allocation2 + $0xb10] sm:$0xff]
    %v395 = vld [vmem:[#allocation2 + $0xb18] sm:$0xff]
    %v396 = vld [vmem:[#allocation2 + $0xb20] sm:$0xff]
    %v397 = vld [vmem:[#allocation2 + $0xb28] sm:$0xff]
    %v398 = vld [vmem:[#allocation2 + $0xb30] sm:$0xff]
    %v399 = vld [vmem:[#allocation2 + $0xb38] sm:$0xff]
    %v400 = vld [vmem:[#allocation2 + $0xb40] sm:$0xff]
    %v401 = vld [vmem:[#allocation2 + $0xb48] sm:$0xff]
    %v402 = vld [vmem:[#allocation2 + $0xb50] sm:$0xff]
    %v403 = vld [vmem:[#allocation2 + $0xb58] sm:$0xff]
    %v404 = vld [vmem:[#allocation2 + $0xb60] sm:$0xff]
    %v405 = vld [vmem:[#allocation2 + $0xb68] sm:$0xff]
    %v406 = vld [vmem:[#allocation2 + $0xb70] sm:$0xff]
    %v407 = vld [vmem:[#allocation2 + $0xb78] sm:$0xff]
    %v408 = vld [vmem:[#allocation2 + $0xb80] sm:$0xff]
    %v409 = vld [vmem:[#allocation2 + $0xb88] sm:$0xff]
    %v410 = vld [vmem:[#allocation2 + $0xb90] sm:$0xff]
    %v411 = vld [vmem:[#allocation2 + $0xb98] sm:$0xff]
    %v412 = vld [vmem:[#allocation2 + $0xba0] sm:$0xff]
    %v413 = vld [vmem:[#allocation2 + $0xba8] sm:$0xff]
    %v414 = vld [vmem:[#allocation2 + $0xbb0] sm:$0xff]
    %v415 = vld [vmem:[#allocation2 + $0xbb8] sm:$0xff]
    %v416 = vld [vmem:[#allocation2 + $0xbc0] sm:$0xff]
    %v417 = vld [vmem:[#allocation2 + $0xbc8] sm:$0xff]
    %v418 = vld [vmem:[#allocation2 + $0xbd0] sm:$0xff]
    %v419 = vld [vmem:[#allocation2 + $0xbd8] sm:$0xff]
    %v420 = vld [vmem:[#allocation2 + $0xbe0] sm:$0xff]
    %v421 = vld [vmem:[#allocation2 + $0xbe8] sm:$0xff]
    %v422 = vld [vmem:[#allocation2 + $0xbf0] sm:$0xff]
    %v423 = vld [vmem:[#allocation2 + $0xbf8] sm:$0xff]
    %v424 = vld [vmem:[#allocation2 + $0xc00] sm:$0xff]
    %v425 = vld [vmem:[#allocation2 + $0xc08] sm:$0xff]
    %v426 = vld [vmem:[#allocation2 + $0xc10] sm:$0xff]
    %v427 = vld [vmem:[#allocation2 + $0xc18] sm:$0xff]
    %v428 = vld [vmem:[#allocation2 + $0xc20] sm:$0xff]
    %v429 = vld [vmem:[#allocation2 + $0xc28] sm:$0xff]
    %v430 = vld [vmem:[#allocation2 + $0xc30] sm:$0xff]
    %v431 = vld [vmem:[#allocation2 + $0xc38] sm:$0xff]
    %v432 = vld [vmem:[#allocation2 + $0xc40] sm:$0xff]
    %v433 = vld [vmem:[#allocation2 + $0xc48] sm:$0xff]
    %v434 = vld [vmem:[#allocation2 + $0xc50] sm:$0xff]
    %v435 = vld [vmem:[#allocation2 + $0xc58] sm:$0xff]
    %v436 = vld [vmem:[#allocation2 + $0xc60] sm:$0xff]
    %v437 = vld [vmem:[#allocation2 + $0xc68] sm:$0xff]
    %v438 = vld [vmem:[#allocation2 + $0xc70] sm:$0xff]
    %v439 = vld [vmem:[#allocation2 + $0xc78] sm:$0xff]
    %v440 = vld [vmem:[#allocation2 + $0xc80] sm:$0xff]
    %v441 = vld [vmem:[#allocation2 + $0xc88] sm:$0xff]
    %v442 = vld [vmem:[#allocation2 + $0xc90] sm:$0xff]
    %v443 = vld [vmem:[#allocation2 + $0xc98] sm:$0xff]
    %v444 = vld [vmem:[#allocation2 + $0xca0] sm:$0xff]
    %v445 = vld [vmem:[#allocation2 + $0xca8] sm:$0xff]
    %v446 = vld [vmem:[#allocation2 + $0xcb0] sm:$0xff]
    %v447 = vld [vmem:[#allocation2 + $0xcb8] sm:$0xff]
    %v448 = vld [vmem:[#allocation2 + $0xcc0] sm:$0xff]
    %v449 = vld [vmem:[#allocation2 + $0xcc8] sm:$0xff]
    %v450 = vld [vmem:[#allocation2 + $0xcd0] sm:$0xff]
    %v451 = vld [vmem:[#allocation2 + $0xcd8] sm:$0xff]
    %v452 = vld [vmem:[#allocation2 + $0xce0] sm:$0xff]
    %v453 = vld [vmem:[#allocation2 + $0xce8] sm:$0xff]
    %v454 = vld [vmem:[#allocation2 + $0xcf0] sm:$0xff]
    %v455 = vld [vmem:[#allocation2 + $0xcf8] sm:$0xff]
    %v456 = vld [vmem:[#allocation2 + $0xd00] sm:$0xff]
    %v457 = vld [vmem:[#allocation2 + $0xd08] sm:$0xff]
    %v458 = vld [vmem:[#allocation2 + $0xd10] sm:$0xff]
    %v459 = vld [vmem:[#allocation2 + $0xd18] sm:$0xff]
    %v460 = vld [vmem:[#allocation2 + $0xd20] sm:$0xff]
    %v461 = vld [vmem:[#allocation2 + $0xd28] sm:$0xff]
    %v462 = vld [vmem:[#allocation2 + $0xd30] sm:$0xff]
    %v463 = vld [vmem:[#allocation2 + $0xd38] sm:$0xff]
    %v464 = vld [vmem:[#allocation2 + $0xd40] sm:$0xff]
    %v465 = vld [vmem:[#allocation2 + $0xd48] sm:$0xff]
    %v466 = vld [vmem:[#allocation2 + $0xd50] sm:$0xff]
    %v467 = vld [vmem:[#allocation2 + $0xd58] sm:$0xff]
    %v468 = vld [vmem:[#allocation2 + $0xd60] sm:$0xff]
    %v469 = vld [vmem:[#allocation2 + $0xd68] sm:$0xff]
    %v470 = vld [vmem:[#allocation2 + $0xd70] sm:$0xff]
    %v471 = vld [vmem:[#allocation2 + $0xd78] sm:$0xff]
    %v472 = vld [vmem:[#allocation2 + $0xd80] sm:$0xff]
    %v473 = vld [vmem:[#allocation2 + $0xd88] sm:$0xff]
    %v474 = vld [vmem:[#allocation2 + $0xd90] sm:$0xff]
    %v475 = vld [vmem:[#allocation2 + $0xd98] sm:$0xff]
    %v476 = vld [vmem:[#allocation2 + $0xda0] sm:$0xff]
    %v477 = vld [vmem:[#allocation2 + $0xda8] sm:$0xff]
    %v478 = vld [vmem:[#allocation2 + $0xdb0] sm:$0xff]
    %v479 = vld [vmem:[#allocation2 + $0xdb8] sm:$0xff]
    %v480 = vld [vmem:[#allocation2 + $0xdc0] sm:$0xff]
    %v481 = vld [vmem:[#allocation2 + $0xdc8] sm:$0xff]
    %v482 = vld [vmem:[#allocation2 + $0xdd0] sm:$0xff]
    %v483 = vld [vmem:[#allocation2 + $0xdd8] sm:$0xff]
    %v484 = vld [vmem:[#allocation2 + $0xde0] sm:$0xff]
    %v485 = vld [vmem:[#allocation2 + $0xde8] sm:$0xff]
    %v486 = vld [vmem:[#allocation2 + $0xdf0] sm:$0xff]
    %v487 = vld [vmem:[#allocation2 + $0xdf8] sm:$0xff]
    %v488 = vld [vmem:[#allocation2 + $0xe00] sm:$0xff]
    %v489 = vld [vmem:[#allocation2 + $0xe08] sm:$0xff]
    %v490 = vld [vmem:[#allocation2 + $0xe10] sm:$0xff]
    %v491 = vld [vmem:[#allocation2 + $0xe18] sm:$0xff]
    %v492 = vld [vmem:[#allocation2 + $0xe20] sm:$0xff]
    %v493 = vld [vmem:[#allocation2 + $0xe28] sm:$0xff]
    %v494 = vld [vmem:[#allocation2 + $0xe30] sm:$0xff]
    %v495 = vld [vmem:[#allocation2 + $0xe38] sm:$0xff]
    %v496 = vld [vmem:[#allocation2 + $0xe40] sm:$0xff]
    %v497 = vld [vmem:[#allocation2 + $0xe48] sm:$0xff]
    %v498 = vld [vmem:[#allocation2 + $0xe50] sm:$0xff]
    %v499 = vld [vmem:[#allocation2 + $0xe58] sm:$0xff]
    %v500 = vld [vmem:[#allocation2 + $0xe60] sm:$0xff]
    %v501 = vld [vmem:[#allocation2 + $0xe68] sm:$0xff]
    %v502 = vld [vmem:[#allocation2 + $0xe70] sm:$0xff]
    %v503 = vld [vmem:[#allocation2 + $0xe78] sm:$0xff]
    %v504 = vld [vmem:[#allocation2 + $0xe80] sm:$0xff]
    %v505 = vld [vmem:[#allocation2 + $0xe88] sm:$0xff]
    %v506 = vld [vmem:[#allocation2 + $0xe90] sm:$0xff]
    %v507 = vld [vmem:[#allocation2 + $0xe98] sm:$0xff]
    %v508 = vld [vmem:[#allocation2 + $0xea0] sm:$0xff]
    %v509 = vld [vmem:[#allocation2 + $0xea8] sm:$0xff]
    %v510 = vld [vmem:[#allocation2 + $0xeb0] sm:$0xff]
    %v511 = vld [vmem:[#allocation2 + $0xeb8] sm:$0xff]
    %v512 = vld [vmem:[#allocation2 + $0xec0] sm:$0xff]
    %v513 = vld [vmem:[#allocation2 + $0xec8] sm:$0xff]
    %v514 = vld [vmem:[#allocation2 + $0xed0] sm:$0xff]
    %v515 = vld [vmem:[#allocation2 + $0xed8] sm:$0xff]
    %v516 = vld [vmem:[#allocation2 + $0xee0] sm:$0xff]
    %v517 = vld [vmem:[#allocation2 + $0xee8] sm:$0xff]
    %v518 = vld [vmem:[#allocation2 + $0xef0] sm:$0xff]
    %v519 = vld [vmem:[#allocation2 + $0xef8] sm:$0xff]
    %v520 = vld [vmem:[#allocation2 + $0xf00] sm:$0xff]
    %v521 = vld [vmem:[#allocation2 + $0xf08] sm:$0xff]
    %v522 = vld [vmem:[#allocation2 + $0xf10] sm:$0xff]
    %v523 = vld [vmem:[#allocation2 + $0xf18] sm:$0xff]
    %v524 = vld [vmem:[#allocation2 + $0xf20] sm:$0xff]
    %v525 = vld [vmem:[#allocation2 + $0xf28] sm:$0xff]
    %v526 = vld [vmem:[#allocation2 + $0xf30] sm:$0xff]
    %v527 = vld [vmem:[#allocation2 + $0xf38] sm:$0xff]
    %v528 = vld [vmem:[#allocation2 + $0xf40] sm:$0xff]
    %v529 = vld [vmem:[#allocation2 + $0xf48] sm:$0xff]
    %v530 = vld [vmem:[#allocation2 + $0xf50] sm:$0xff]
    %v531 = vld [vmem:[#allocation2 + $0xf58] sm:$0xff]
    %v532 = vld [vmem:[#allocation2 + $0xf60] sm:$0xff]
    %v533 = vld [vmem:[#allocation2 + $0xf68] sm:$0xff]
    %v534 = vld [vmem:[#allocation2 + $0xf70] sm:$0xff]
    %v535 = vld [vmem:[#allocation2 + $0xf78] sm:$0xff]
    %v536 = vld [vmem:[#allocation2 + $0xf80] sm:$0xff]
    %v537 = vld [vmem:[#allocation2 + $0xf88] sm:$0xff]
    %v538 = vld [vmem:[#allocation2 + $0xf90] sm:$0xff]
    %v539 = vld [vmem:[#allocation2 + $0xf98] sm:$0xff]
    %v540 = vld [vmem:[#allocation2 + $0xfa0] sm:$0xff]
    %v541 = vld [vmem:[#allocation2 + $0xfa8] sm:$0xff]
    %v542 = vld [vmem:[#allocation2 + $0xfb0] sm:$0xff]
    %v543 = vld [vmem:[#allocation2 + $0xfb8] sm:$0xff]
    %v544 = vld [vmem:[#allocation2 + $0xfc0] sm:$0xff]
    %v545 = vld [vmem:[#allocation2 + $0xfc8] sm:$0xff]
    %v546 = vld [vmem:[#allocation2 + $0xfd0] sm:$0xff]
    %v547 = vld [vmem:[#allocation2 + $0xfd8] sm:$0xff]
    %v548 = vld [vmem:[#allocation2 + $0xfe0] sm:$0xff]
    %v549 = vld [vmem:[#allocation2 + $0xfe8] sm:$0xff]
    %v550 = vld [vmem:[#allocation2 + $0xff0] sm:$0xff]
    %v551 = vld [vmem:[#allocation2 + $0xff8] sm:$0xff]
    %v552 = vld [vmem:[#allocation5] sm:$0xff]
    %v553 = vld [vmem:[#allocation5 + $0x8] sm:$0xff]
    %v554 = vld [vmem:[#allocation5 + $0x10] sm:$0xff]
    %v555 = vld [vmem:[#allocation5 + $0x18] sm:$0xff]
    %v556 = vld [vmem:[#allocation5 + $0x20] sm:$0xff]
    %v557 = vld [vmem:[#allocation5 + $0x28] sm:$0xff]
    %v558 = vld [vmem:[#allocation5 + $0x30] sm:$0xff]
    %v559 = vld [vmem:[#allocation5 + $0x38] sm:$0xff]
    %v560 = vld [vmem:[#allocation5 + $0x40] sm:$0xff]
    %v561 = vld [vmem:[#allocation5 + $0x48] sm:$0xff]
    %v562 = vld [vmem:[#allocation5 + $0x50] sm:$0xff]
    %v563 = vld [vmem:[#allocation5 + $0x58] sm:$0xff]
    %v564 = vld [vmem:[#allocation5 + $0x60] sm:$0xff]
    %v565 = vld [vmem:[#allocation5 + $0x68] sm:$0xff]
    %v566 = vld [vmem:[#allocation5 + $0x70] sm:$0xff]
    %v567 = vld [vmem:[#allocation5 + $0x78] sm:$0xff]
    %v568 = vld [vmem:[#allocation5 + $0x80] sm:$0xff]
    %v569 = vld [vmem:[#allocation5 + $0x88] sm:$0xff]
    %v570 = vld [vmem:[#allocation5 + $0x90] sm:$0xff]
    %v571 = vld [vmem:[#allocation5 + $0x98] sm:$0xff]
    %v572 = vld [vmem:[#allocation5 + $0xa0] sm:$0xff]
    %v573 = vld [vmem:[#allocation5 + $0xa8] sm:$0xff]
    %v574 = vld [vmem:[#allocation5 + $0xb0] sm:$0xff]
    %v575 = vld [vmem:[#allocation5 + $0xb8] sm:$0xff]
    %v576 = vld [vmem:[#allocation5 + $0xc0] sm:$0xff]
    %v577 = vld [vmem:[#allocation5 + $0xc8] sm:$0xff]
    %v578 = vld [vmem:[#allocation5 + $0xd0] sm:$0xff]
    %v579 = vld [vmem:[#allocation5 + $0xd8] sm:$0xff]
    %v580 = vld [vmem:[#allocation5 + $0xe0] sm:$0xff]
    %v581 = vld [vmem:[#allocation5 + $0xe8] sm:$0xff]
    %v582 = vld [vmem:[#allocation5 + $0xf0] sm:$0xff]
    %v583 = vld [vmem:[#allocation5 + $0xf8] sm:$0xff]
    %v584 = vld [vmem:[#allocation5 + $0x100] sm:$0xff]
    %v585 = vld [vmem:[#allocation5 + $0x108] sm:$0xff]
    %v586 = vld [vmem:[#allocation5 + $0x110] sm:$0xff]
    %v587 = vld [vmem:[#allocation5 + $0x118] sm:$0xff]
    %v588 = vld [vmem:[#allocation5 + $0x120] sm:$0xff]
    %v589 = vld [vmem:[#allocation5 + $0x128] sm:$0xff]
    %v590 = vld [vmem:[#allocation5 + $0x130] sm:$0xff]
    %v591 = vld [vmem:[#allocation5 + $0x138] sm:$0xff]
    %v592 = vld [vmem:[#allocation5 + $0x140] sm:$0xff]
    %v593 = vld [vmem:[#allocation5 + $0x148] sm:$0xff]
    %v594 = vld [vmem:[#allocation5 + $0x150] sm:$0xff]
    %v595 = vld [vmem:[#allocation5 + $0x158] sm:$0xff]
    %v596 = vld [vmem:[#allocation5 + $0x160] sm:$0xff]
    %v597 = vld [vmem:[#allocation5 + $0x168] sm:$0xff]
    %v598 = vld [vmem:[#allocation5 + $0x170] sm:$0xff]
    %v599 = vld [vmem:[#allocation5 + $0x178] sm:$0xff]
    %v600 = vld [vmem:[#allocation5 + $0x180] sm:$0xff]
    %v601 = vld [vmem:[#allocation5 + $0x188] sm:$0xff]
    %v602 = vld [vmem:[#allocation5 + $0x190] sm:$0xff]
    %v603 = vld [vmem:[#allocation5 + $0x198] sm:$0xff]
    %v604 = vld [vmem:[#allocation5 + $0x1a0] sm:$0xff]
    %v605 = vld [vmem:[#allocation5 + $0x1a8] sm:$0xff]
    %v606 = vld [vmem:[#allocation5 + $0x1b0] sm:$0xff]
    %v607 = vld [vmem:[#allocation5 + $0x1b8] sm:$0xff]
    %v608 = vld [vmem:[#allocation5 + $0x1c0] sm:$0xff]
    %v609 = vld [vmem:[#allocation5 + $0x1c8] sm:$0xff]
    %v610 = vld [vmem:[#allocation5 + $0x1d0] sm:$0xff]
    %v611 = vld [vmem:[#allocation5 + $0x1d8] sm:$0xff]
    %v612 = vld [vmem:[#allocation5 + $0x1e0] sm:$0xff]
    %v613 = vld [vmem:[#allocation5 + $0x1e8] sm:$0xff]
    %v614 = vld [vmem:[#allocation5 + $0x1f0] sm:$0xff]
    %v615 = vld [vmem:[#allocation5 + $0x1f8] sm:$0xff]
    %v616 = vld [vmem:[#allocation5 + $0x200] sm:$0xff]
    %v617 = vld [vmem:[#allocation5 + $0x208] sm:$0xff]
    %v618 = vld [vmem:[#allocation5 + $0x210] sm:$0xff]
    %v619 = vld [vmem:[#allocation5 + $0x218] sm:$0xff]
    %v620 = vld [vmem:[#allocation5 + $0x220] sm:$0xff]
    %v621 = vld [vmem:[#allocation5 + $0x228] sm:$0xff]
    %v622 = vld [vmem:[#allocation5 + $0x230] sm:$0xff]
    %v623 = vld [vmem:[#allocation5 + $0x238] sm:$0xff]
    %v624 = vld [vmem:[#allocation5 + $0x240] sm:$0xff]
    %v625 = vld [vmem:[#allocation5 + $0x248] sm:$0xff]
    %v626 = vld [vmem:[#allocation5 + $0x250] sm:$0xff]
    %v627 = vld [vmem:[#allocation5 + $0x258] sm:$0xff]
    %v628 = vld [vmem:[#allocation5 + $0x260] sm:$0xff]
    %v629 = vld [vmem:[#allocation5 + $0x268] sm:$0xff]
    %v630 = vld [vmem:[#allocation5 + $0x270] sm:$0xff]
    %v631 = vld [vmem:[#allocation5 + $0x278] sm:$0xff]
    %v632 = vld [vmem:[#allocation5 + $0x280] sm:$0xff]
    %v633 = vld [vmem:[#allocation5 + $0x288] sm:$0xff]
    %v634 = vld [vmem:[#allocation5 + $0x290] sm:$0xff]
    %v635 = vld [vmem:[#allocation5 + $0x298] sm:$0xff]
    %v636 = vld [vmem:[#allocation5 + $0x2a0] sm:$0xff]
    %v637 = vld [vmem:[#allocation5 + $0x2a8] sm:$0xff]
    %v638 = vld [vmem:[#allocation5 + $0x2b0] sm:$0xff]
    %v639 = vld [vmem:[#allocation5 + $0x2b8] sm:$0xff]
    %v640 = vld [vmem:[#allocation5 + $0x2c0] sm:$0xff]
    %v641 = vld [vmem:[#allocation5 + $0x2c8] sm:$0xff]
    %v642 = vld [vmem:[#allocation5 + $0x2d0] sm:$0xff]
    %v643 = vld [vmem:[#allocation5 + $0x2d8] sm:$0xff]
    %v644 = vld [vmem:[#allocation5 + $0x2e0] sm:$0xff]
    %v645 = vld [vmem:[#allocation5 + $0x2e8] sm:$0xff]
    %v646 = vld [vmem:[#allocation5 + $0x2f0] sm:$0xff]
    %v647 = vld [vmem:[#allocation5 + $0x2f8] sm:$0xff]
    %v648 = vld [vmem:[#allocation5 + $0x300] sm:$0xff]
    %v649 = vld [vmem:[#allocation5 + $0x308] sm:$0xff]
    %v650 = vld [vmem:[#allocation5 + $0x310] sm:$0xff]
    %v651 = vld [vmem:[#allocation5 + $0x318] sm:$0xff]
    %v652 = vld [vmem:[#allocation5 + $0x320] sm:$0xff]
    %v653 = vld [vmem:[#allocation5 + $0x328] sm:$0xff]
    %v654 = vld [vmem:[#allocation5 + $0x330] sm:$0xff]
    %v655 = vld [vmem:[#allocation5 + $0x338] sm:$0xff]
    %v656 = vld [vmem:[#allocation5 + $0x340] sm:$0xff]
    %v657 = vld [vmem:[#allocation5 + $0x348] sm:$0xff]
    %v658 = vld [vmem:[#allocation5 + $0x350] sm:$0xff]
    %v659 = vld [vmem:[#allocation5 + $0x358] sm:$0xff]
    %v660 = vld [vmem:[#allocation5 + $0x360] sm:$0xff]
    %v661 = vld [vmem:[#allocation5 + $0x368] sm:$0xff]
    %v662 = vld [vmem:[#allocation5 + $0x370] sm:$0xff]
    %v663 = vld [vmem:[#allocation5 + $0x378] sm:$0xff]
    %v664 = vld [vmem:[#allocation5 + $0x380] sm:$0xff]
    %v665 = vld [vmem:[#allocation5 + $0x388] sm:$0xff]
    %v666 = vld [vmem:[#allocation5 + $0x390] sm:$0xff]
    %v667 = vld [vmem:[#allocation5 + $0x398] sm:$0xff]
    %v668 = vld [vmem:[#allocation5 + $0x3a0] sm:$0xff]
    %v669 = vld [vmem:[#allocation5 + $0x3a8] sm:$0xff]
    %v670 = vld [vmem:[#allocation5 + $0x3b0] sm:$0xff]
    %v671 = vld [vmem:[#allocation5 + $0x3b8] sm:$0xff]
    %v672 = vld [vmem:[#allocation5 + $0x3c0] sm:$0xff]
    %v673 = vld [vmem:[#allocation5 + $0x3c8] sm:$0xff]
    %v674 = vld [vmem:[#allocation5 + $0x3d0] sm:$0xff]
    %v675 = vld [vmem:[#allocation5 + $0x3d8] sm:$0xff]
    %v676 = vld [vmem:[#allocation5 + $0x3e0] sm:$0xff]
    %v677 = vld [vmem:[#allocation5 + $0x3e8] sm:$0xff]
    %v678 = vld [vmem:[#allocation5 + $0x3f0] sm:$0xff]
    %v679 = vld [vmem:[#allocation5 + $0x3f8] sm:$0xff]
    %v680 = vld [vmem:[#allocation5 + $0x400] sm:$0xff]
    %v681 = vld [vmem:[#allocation5 + $0x408] sm:$0xff]
    %v682 = vld [vmem:[#allocation5 + $0x410] sm:$0xff]
    %v683 = vld [vmem:[#allocation5 + $0x418] sm:$0xff]
    %v684 = vld [vmem:[#allocation5 + $0x420] sm:$0xff]
    %v685 = vld [vmem:[#allocation5 + $0x428] sm:$0xff]
    %v686 = vld [vmem:[#allocation5 + $0x430] sm:$0xff]
    %v687 = vld [vmem:[#allocation5 + $0x438] sm:$0xff]
    %v688 = vld [vmem:[#allocation5 + $0x440] sm:$0xff]
    %v689 = vld [vmem:[#allocation5 + $0x448] sm:$0xff]
    %v690 = vld [vmem:[#allocation5 + $0x450] sm:$0xff]
    %v691 = vld [vmem:[#allocation5 + $0x458] sm:$0xff]
    %v692 = vld [vmem:[#allocation5 + $0x460] sm:$0xff]
    %v693 = vld [vmem:[#allocation5 + $0x468] sm:$0xff]
    %v694 = vld [vmem:[#allocation5 + $0x470] sm:$0xff]
    %v695 = vld [vmem:[#allocation5 + $0x478] sm:$0xff]
    %v696 = vld [vmem:[#allocation5 + $0x480] sm:$0xff]
    %v697 = vld [vmem:[#allocation5 + $0x488] sm:$0xff]
    %v698 = vld [vmem:[#allocation5 + $0x490] sm:$0xff]
    %v699 = vld [vmem:[#allocation5 + $0x498] sm:$0xff]
    %v700 = vld [vmem:[#allocation5 + $0x4a0] sm:$0xff]
    %v701 = vld [vmem:[#allocation5 + $0x4a8] sm:$0xff]
    %v702 = vld [vmem:[#allocation5 + $0x4b0] sm:$0xff]
    %v703 = vld [vmem:[#allocation5 + $0x4b8] sm:$0xff]
    %v704 = vld [vmem:[#allocation5 + $0x4c0] sm:$0xff]
    %v705 = vld [vmem:[#allocation5 + $0x4c8] sm:$0xff]
    %v706 = vld [vmem:[#allocation5 + $0x4d0] sm:$0xff]
    %v707 = vld [vmem:[#allocation5 + $0x4d8] sm:$0xff]
    %v708 = vld [vmem:[#allocation5 + $0x4e0] sm:$0xff]
    %v709 = vld [vmem:[#allocation5 + $0x4e8] sm:$0xff]
    %v710 = vld [vmem:[#allocation5 + $0x4f0] sm:$0xff]
    %v711 = vld [vmem:[#allocation5 + $0x4f8] sm:$0xff]
    %v712 = vld [vmem:[#allocation5 + $0x500] sm:$0xff]
    %v713 = vld [vmem:[#allocation5 + $0x508] sm:$0xff]
    %v714 = vld [vmem:[#allocation5 + $0x510] sm:$0xff]
    %v715 = vld [vmem:[#allocation5 + $0x518] sm:$0xff]
    %v716 = vld [vmem:[#allocation5 + $0x520] sm:$0xff]
    %v717 = vld [vmem:[#allocation5 + $0x528] sm:$0xff]
    %v718 = vld [vmem:[#allocation5 + $0x530] sm:$0xff]
    %v719 = vld [vmem:[#allocation5 + $0x538] sm:$0xff]
    %v720 = vld [vmem:[#allocation5 + $0x540] sm:$0xff]
    %v721 = vld [vmem:[#allocation5 + $0x548] sm:$0xff]
    %v722 = vld [vmem:[#allocation5 + $0x550] sm:$0xff]
    %v723 = vld [vmem:[#allocation5 + $0x558] sm:$0xff]
    %v724 = vld [vmem:[#allocation5 + $0x560] sm:$0xff]
    %v725 = vld [vmem:[#allocation5 + $0x568] sm:$0xff]
    %v726 = vld [vmem:[#allocation5 + $0x570] sm:$0xff]
    %v727 = vld [vmem:[#allocation5 + $0x578] sm:$0xff]
    %v728 = vld [vmem:[#allocation5 + $0x580] sm:$0xff]
    %v729 = vld [vmem:[#allocation5 + $0x588] sm:$0xff]
    %v730 = vld [vmem:[#allocation5 + $0x590] sm:$0xff]
    %v731 = vld [vmem:[#allocation5 + $0x598] sm:$0xff]
    %v732 = vld [vmem:[#allocation5 + $0x5a0] sm:$0xff]
    %v733 = vld [vmem:[#allocation5 + $0x5a8] sm:$0xff]
    %v734 = vld [vmem:[#allocation5 + $0x5b0] sm:$0xff]
    %v735 = vld [vmem:[#allocation5 + $0x5b8] sm:$0xff]
    %v736 = vld [vmem:[#allocation5 + $0x5c0] sm:$0xff]
    %v737 = vld [vmem:[#allocation5 + $0x5c8] sm:$0xff]
    %v738 = vld [vmem:[#allocation5 + $0x5d0] sm:$0xff]
    %v739 = vld [vmem:[#allocation5 + $0x5d8] sm:$0xff]
    %v740 = vld [vmem:[#allocation5 + $0x5e0] sm:$0xff]
    %v741 = vld [vmem:[#allocation5 + $0x5e8] sm:$0xff]
    %v742 = vld [vmem:[#allocation5 + $0x5f0] sm:$0xff]
    %v743 = vld [vmem:[#allocation5 + $0x5f8] sm:$0xff]
    %v744 = vld [vmem:[#allocation5 + $0x600] sm:$0xff]
    %v745 = vld [vmem:[#allocation5 + $0x608] sm:$0xff]
    %v746 = vld [vmem:[#allocation5 + $0x610] sm:$0xff]
    %v747 = vld [vmem:[#allocation5 + $0x618] sm:$0xff]
    %v748 = vld [vmem:[#allocation5 + $0x620] sm:$0xff]
    %v749 = vld [vmem:[#allocation5 + $0x628] sm:$0xff]
    %v750 = vld [vmem:[#allocation5 + $0x630] sm:$0xff]
    %v751 = vld [vmem:[#allocation5 + $0x638] sm:$0xff]
    %v752 = vld [vmem:[#allocation5 + $0x640] sm:$0xff]
    %v753 = vld [vmem:[#allocation5 + $0x648] sm:$0xff]
    %v754 = vld [vmem:[#allocation5 + $0x650] sm:$0xff]
    %v755 = vld [vmem:[#allocation5 + $0x658] sm:$0xff]
    %v756 = vld [vmem:[#allocation5 + $0x660] sm:$0xff]
    %v757 = vld [vmem:[#allocation5 + $0x668] sm:$0xff]
    %v758 = vld [vmem:[#allocation5 + $0x670] sm:$0xff]
    %v759 = vld [vmem:[#allocation5 + $0x678] sm:$0xff]
    %v760 = vld [vmem:[#allocation5 + $0x680] sm:$0xff]
    %v761 = vld [vmem:[#allocation5 + $0x688] sm:$0xff]
    %v762 = vld [vmem:[#allocation5 + $0x690] sm:$0xff]
    %v763 = vld [vmem:[#allocation5 + $0x698] sm:$0xff]
    %v764 = vld [vmem:[#allocation5 + $0x6a0] sm:$0xff]
    %v765 = vld [vmem:[#allocation5 + $0x6a8] sm:$0xff]
    %v766 = vld [vmem:[#allocation5 + $0x6b0] sm:$0xff]
    %v767 = vld [vmem:[#allocation5 + $0x6b8] sm:$0xff]
    %v768 = vld [vmem:[#allocation5 + $0x6c0] sm:$0xff]
    %v769 = vld [vmem:[#allocation5 + $0x6c8] sm:$0xff]
    %v770 = vld [vmem:[#allocation5 + $0x6d0] sm:$0xff]
    %v771 = vld [vmem:[#allocation5 + $0x6d8] sm:$0xff]
    %v772 = vld [vmem:[#allocation5 + $0x6e0] sm:$0xff]
    %v773 = vld [vmem:[#allocation5 + $0x6e8] sm:$0xff]
    %v774 = vld [vmem:[#allocation5 + $0x6f0] sm:$0xff]
    %v775 = vld [vmem:[#allocation5 + $0x6f8] sm:$0xff]
    %v776 = vld [vmem:[#allocation5 + $0x700] sm:$0xff]
    %v777 = vld [vmem:[#allocation5 + $0x708] sm:$0xff]
    %v778 = vld [vmem:[#allocation5 + $0x710] sm:$0xff]
    %v779 = vld [vmem:[#allocation5 + $0x718] sm:$0xff]
    %v780 = vld [vmem:[#allocation5 + $0x720] sm:$0xff]
    %v781 = vld [vmem:[#allocation5 + $0x728] sm:$0xff]
    %v782 = vld [vmem:[#allocation5 + $0x730] sm:$0xff]
    %v783 = vld [vmem:[#allocation5 + $0x738] sm:$0xff]
    %v784 = vld [vmem:[#allocation5 + $0x740] sm:$0xff]
    %v785 = vld [vmem:[#allocation5 + $0x748] sm:$0xff]
    %v786 = vld [vmem:[#allocation5 + $0x750] sm:$0xff]
    %v787 = vld [vmem:[#allocation5 + $0x758] sm:$0xff]
    %v788 = vld [vmem:[#allocation5 + $0x760] sm:$0xff]
    %v789 = vld [vmem:[#allocation5 + $0x768] sm:$0xff]
    %v790 = vld [vmem:[#allocation5 + $0x770] sm:$0xff]
    %v791 = vld [vmem:[#allocation5 + $0x778] sm:$0xff]
    %v792 = vld [vmem:[#allocation5 + $0x780] sm:$0xff]
    %v793 = vld [vmem:[#allocation5 + $0x788] sm:$0xff]
    %v794 = vld [vmem:[#allocation5 + $0x790] sm:$0xff]
    %v795 = vld [vmem:[#allocation5 + $0x798] sm:$0xff]
    %v796 = vld [vmem:[#allocation5 + $0x7a0] sm:$0xff]
    %v797 = vld [vmem:[#allocation5 + $0x7a8] sm:$0xff]
    %v798 = vld [vmem:[#allocation5 + $0x7b0] sm:$0xff]
    %v799 = vld [vmem:[#allocation5 + $0x7b8] sm:$0xff]
    %v800 = vld [vmem:[#allocation5 + $0x7c0] sm:$0xff]
    %v801 = vld [vmem:[#allocation5 + $0x7c8] sm:$0xff]
    %v802 = vld [vmem:[#allocation5 + $0x7d0] sm:$0xff]
    %v803 = vld [vmem:[#allocation5 + $0x7d8] sm:$0xff]
    %v804 = vld [vmem:[#allocation5 + $0x7e0] sm:$0xff]
    %v805 = vld [vmem:[#allocation5 + $0x7e8] sm:$0xff]
    %v806 = vld [vmem:[#allocation5 + $0x7f0] sm:$0xff]
    %v807 = vld [vmem:[#allocation5 + $0x7f8] sm:$0xff]
    %v808 = vld [vmem:[#allocation5 + $0x800] sm:$0xff]
    %v809 = vld [vmem:[#allocation5 + $0x808] sm:$0xff]
    %v810 = vld [vmem:[#allocation5 + $0x810] sm:$0xff]
    %v811 = vld [vmem:[#allocation5 + $0x818] sm:$0xff]
    %v812 = vld [vmem:[#allocation5 + $0x820] sm:$0xff]
    %v813 = vld [vmem:[#allocation5 + $0x828] sm:$0xff]
    %v814 = vld [vmem:[#allocation5 + $0x830] sm:$0xff]
    %v815 = vld [vmem:[#allocation5 + $0x838] sm:$0xff]
    %v816 = vld [vmem:[#allocation5 + $0x840] sm:$0xff]
    %v817 = vld [vmem:[#allocation5 + $0x848] sm:$0xff]
    %v818 = vld [vmem:[#allocation5 + $0x850] sm:$0xff]
    %v819 = vld [vmem:[#allocation5 + $0x858] sm:$0xff]
    %v820 = vld [vmem:[#allocation5 + $0x860] sm:$0xff]
    %v821 = vld [vmem:[#allocation5 + $0x868] sm:$0xff]
    %v822 = vld [vmem:[#allocation5 + $0x870] sm:$0xff]
    %v823 = vld [vmem:[#allocation5 + $0x878] sm:$0xff]
    %v824 = vld [vmem:[#allocation5 + $0x880] sm:$0xff]
    %v825 = vld [vmem:[#allocation5 + $0x888] sm:$0xff]
    %v826 = vld [vmem:[#allocation5 + $0x890] sm:$0xff]
    %v827 = vld [vmem:[#allocation5 + $0x898] sm:$0xff]
    %v828 = vld [vmem:[#allocation5 + $0x8a0] sm:$0xff]
    %v829 = vld [vmem:[#allocation5 + $0x8a8] sm:$0xff]
    %v830 = vld [vmem:[#allocation5 + $0x8b0] sm:$0xff]
    %v831 = vld [vmem:[#allocation5 + $0x8b8] sm:$0xff]
    %v832 = vld [vmem:[#allocation5 + $0x8c0] sm:$0xff]
    %v833 = vld [vmem:[#allocation5 + $0x8c8] sm:$0xff]
    %v834 = vld [vmem:[#allocation5 + $0x8d0] sm:$0xff]
    %v835 = vld [vmem:[#allocation5 + $0x8d8] sm:$0xff]
    %v836 = vld [vmem:[#allocation5 + $0x8e0] sm:$0xff]
    %v837 = vld [vmem:[#allocation5 + $0x8e8] sm:$0xff]
    %v838 = vld [vmem:[#allocation5 + $0x8f0] sm:$0xff]
    %v839 = vld [vmem:[#allocation5 + $0x8f8] sm:$0xff]
    %v840 = vld [vmem:[#allocation5 + $0x900] sm:$0xff]
    %v841 = vld [vmem:[#allocation5 + $0x908] sm:$0xff]
    %v842 = vld [vmem:[#allocation5 + $0x910] sm:$0xff]
    %v843 = vld [vmem:[#allocation5 + $0x918] sm:$0xff]
    %v844 = vld [vmem:[#allocation5 + $0x920] sm:$0xff]
    %v845 = vld [vmem:[#allocation5 + $0x928] sm:$0xff]
    %v846 = vld [vmem:[#allocation5 + $0x930] sm:$0xff]
    %v847 = vld [vmem:[#allocation5 + $0x938] sm:$0xff]
    %v848 = vld [vmem:[#allocation5 + $0x940] sm:$0xff]
    %v849 = vld [vmem:[#allocation5 + $0x948] sm:$0xff]
    %v850 = vld [vmem:[#allocation5 + $0x950] sm:$0xff]
    %v851 = vld [vmem:[#allocation5 + $0x958] sm:$0xff]
    %v852 = vld [vmem:[#allocation5 + $0x960] sm:$0xff]
    %v853 = vld [vmem:[#allocation5 + $0x968] sm:$0xff]
    %v854 = vld [vmem:[#allocation5 + $0x970] sm:$0xff]
    %v855 = vld [vmem:[#allocation5 + $0x978] sm:$0xff]
    %v856 = vld [vmem:[#allocation5 + $0x980] sm:$0xff]
    %v857 = vld [vmem:[#allocation5 + $0x988] sm:$0xff]
    %v858 = vld [vmem:[#allocation5 + $0x990] sm:$0xff]
    %v859 = vld [vmem:[#allocation5 + $0x998] sm:$0xff]
    %v860 = vld [vmem:[#allocation5 + $0x9a0] sm:$0xff]
    %v861 = vld [vmem:[#allocation5 + $0x9a8] sm:$0xff]
    %v862 = vld [vmem:[#allocation5 + $0x9b0] sm:$0xff]
    %v863 = vld [vmem:[#allocation5 + $0x9b8] sm:$0xff]
    %v864 = vld [vmem:[#allocation5 + $0x9c0] sm:$0xff]
    %v865 = vld [vmem:[#allocation5 + $0x9c8] sm:$0xff]
    %v866 = vld [vmem:[#allocation5 + $0x9d0] sm:$0xff]
    %v867 = vld [vmem:[#allocation5 + $0x9d8] sm:$0xff]
    %v868 = vld [vmem:[#allocation5 + $0x9e0] sm:$0xff]
    %v869 = vld [vmem:[#allocation5 + $0x9e8] sm:$0xff]
    %v870 = vld [vmem:[#allocation5 + $0x9f0] sm:$0xff]
    %v871 = vld [vmem:[#allocation5 + $0x9f8] sm:$0xff]
    %v872 = vld [vmem:[#allocation5 + $0xa00] sm:$0xff]
    %v873 = vld [vmem:[#allocation5 + $0xa08] sm:$0xff]
    %v874 = vld [vmem:[#allocation5 + $0xa10] sm:$0xff]
    %v875 = vld [vmem:[#allocation5 + $0xa18] sm:$0xff]
    %v876 = vld [vmem:[#allocation5 + $0xa20] sm:$0xff]
    %v877 = vld [vmem:[#allocation5 + $0xa28] sm:$0xff]
    %v878 = vld [vmem:[#allocation5 + $0xa30] sm:$0xff]
    %v879 = vld [vmem:[#allocation5 + $0xa38] sm:$0xff]
    %v880 = vld [vmem:[#allocation5 + $0xa40] sm:$0xff]
    %v881 = vld [vmem:[#allocation5 + $0xa48] sm:$0xff]
    %v882 = vld [vmem:[#allocation5 + $0xa50] sm:$0xff]
    %v883 = vld [vmem:[#allocation5 + $0xa58] sm:$0xff]
    %v884 = vld [vmem:[#allocation5 + $0xa60] sm:$0xff]
    %v885 = vld [vmem:[#allocation5 + $0xa68] sm:$0xff]
    %v886 = vld [vmem:[#allocation5 + $0xa70] sm:$0xff]
    %v887 = vld [vmem:[#allocation5 + $0xa78] sm:$0xff]
    %v888 = vld [vmem:[#allocation5 + $0xa80] sm:$0xff]
    %v889 = vld [vmem:[#allocation5 + $0xa88] sm:$0xff]
    %v890 = vld [vmem:[#allocation5 + $0xa90] sm:$0xff]
    %v891 = vld [vmem:[#allocation5 + $0xa98] sm:$0xff]
    %v892 = vld [vmem:[#allocation5 + $0xaa0] sm:$0xff]
    %v893 = vld [vmem:[#allocation5 + $0xaa8] sm:$0xff]
    %v894 = vld [vmem:[#allocation5 + $0xab0] sm:$0xff]
    %v895 = vld [vmem:[#allocation5 + $0xab8] sm:$0xff]
    %v896 = vld [vmem:[#allocation5 + $0xac0] sm:$0xff]
    %v897 = vld [vmem:[#allocation5 + $0xac8] sm:$0xff]
    %v898 = vld [vmem:[#allocation5 + $0xad0] sm:$0xff]
    %v899 = vld [vmem:[#allocation5 + $0xad8] sm:$0xff]
    %v900 = vld [vmem:[#allocation5 + $0xae0] sm:$0xff]
    %v901 = vld [vmem:[#allocation5 + $0xae8] sm:$0xff]
    %v902 = vld [vmem:[#allocation5 + $0xaf0] sm:$0xff]
    %v903 = vld [vmem:[#allocation5 + $0xaf8] sm:$0xff]
    %v904 = vld [vmem:[#allocation5 + $0xb00] sm:$0xff]
    %v905 = vld [vmem:[#allocation5 + $0xb08] sm:$0xff]
    %v906 = vld [vmem:[#allocation5 + $0xb10] sm:$0xff]
    %v907 = vld [vmem:[#allocation5 + $0xb18] sm:$0xff]
    %v908 = vld [vmem:[#allocation5 + $0xb20] sm:$0xff]
    %v909 = vld [vmem:[#allocation5 + $0xb28] sm:$0xff]
    %v910 = vld [vmem:[#allocation5 + $0xb30] sm:$0xff]
    %v911 = vld [vmem:[#allocation5 + $0xb38] sm:$0xff]
    %v912 = vld [vmem:[#allocation5 + $0xb40] sm:$0xff]
    %v913 = vld [vmem:[#allocation5 + $0xb48] sm:$0xff]
    %v914 = vld [vmem:[#allocation5 + $0xb50] sm:$0xff]
    %v915 = vld [vmem:[#allocation5 + $0xb58] sm:$0xff]
    %v916 = vld [vmem:[#allocation5 + $0xb60] sm:$0xff]
    %v917 = vld [vmem:[#allocation5 + $0xb68] sm:$0xff]
    %v918 = vld [vmem:[#allocation5 + $0xb70] sm:$0xff]
    %v919 = vld [vmem:[#allocation5 + $0xb78] sm:$0xff]
    %v920 = vld [vmem:[#allocation5 + $0xb80] sm:$0xff]
    %v921 = vld [vmem:[#allocation5 + $0xb88] sm:$0xff]
    %v922 = vld [vmem:[#allocation5 + $0xb90] sm:$0xff]
    %v923 = vld [vmem:[#allocation5 + $0xb98] sm:$0xff]
    %v924 = vld [vmem:[#allocation5 + $0xba0] sm:$0xff]
    %v925 = vld [vmem:[#allocation5 + $0xba8] sm:$0xff]
    %v926 = vld [vmem:[#allocation5 + $0xbb0] sm:$0xff]
    %v927 = vld [vmem:[#allocation5 + $0xbb8] sm:$0xff]
    %v928 = vld [vmem:[#allocation5 + $0xbc0] sm:$0xff]
    %v929 = vld [vmem:[#allocation5 + $0xbc8] sm:$0xff]
    %v930 = vld [vmem:[#allocation5 + $0xbd0] sm:$0xff]
    %v931 = vld [vmem:[#allocation5 + $0xbd8] sm:$0xff]
    %v932 = vld [vmem:[#allocation5 + $0xbe0] sm:$0xff]
    %v933 = vld [vmem:[#allocation5 + $0xbe8] sm:$0xff]
    %v934 = vld [vmem:[#allocation5 + $0xbf0] sm:$0xff]
    %v935 = vld [vmem:[#allocation5 + $0xbf8] sm:$0xff]
    %v936 = vld [vmem:[#allocation5 + $0xc00] sm:$0xff]
    %v937 = vld [vmem:[#allocation5 + $0xc08] sm:$0xff]
    %v938 = vld [vmem:[#allocation5 + $0xc10] sm:$0xff]
    %v939 = vld [vmem:[#allocation5 + $0xc18] sm:$0xff]
    %v940 = vld [vmem:[#allocation5 + $0xc20] sm:$0xff]
    %v941 = vld [vmem:[#allocation5 + $0xc28] sm:$0xff]
    %v942 = vld [vmem:[#allocation5 + $0xc30] sm:$0xff]
    %v943 = vld [vmem:[#allocation5 + $0xc38] sm:$0xff]
    %v944 = vld [vmem:[#allocation5 + $0xc40] sm:$0xff]
    %v945 = vld [vmem:[#allocation5 + $0xc48] sm:$0xff]
    %v946 = vld [vmem:[#allocation5 + $0xc50] sm:$0xff]
    %v947 = vld [vmem:[#allocation5 + $0xc58] sm:$0xff]
    %v948 = vld [vmem:[#allocation5 + $0xc60] sm:$0xff]
    %v949 = vld [vmem:[#allocation5 + $0xc68] sm:$0xff]
    %v950 = vld [vmem:[#allocation5 + $0xc70] sm:$0xff]
    %v951 = vld [vmem:[#allocation5 + $0xc78] sm:$0xff]
    %v952 = vld [vmem:[#allocation5 + $0xc80] sm:$0xff]
    %v953 = vld [vmem:[#allocation5 + $0xc88] sm:$0xff]
    %v954 = vld [vmem:[#allocation5 + $0xc90] sm:$0xff]
    %v955 = vld [vmem:[#allocation5 + $0xc98] sm:$0xff]
    %v956 = vld [vmem:[#allocation5 + $0xca0] sm:$0xff]
    %v957 = vld [vmem:[#allocation5 + $0xca8] sm:$0xff]
    %v958 = vld [vmem:[#allocation5 + $0xcb0] sm:$0xff]
    %v959 = vld [vmem:[#allocation5 + $0xcb8] sm:$0xff]
    %v960 = vld [vmem:[#allocation5 + $0xcc0] sm:$0xff]
    %v961 = vld [vmem:[#allocation5 + $0xcc8] sm:$0xff]
    %v962 = vld [vmem:[#allocation5 + $0xcd0] sm:$0xff]
    %v963 = vld [vmem:[#allocation5 + $0xcd8] sm:$0xff]
    %v964 = vld [vmem:[#allocation5 + $0xce0] sm:$0xff]
    %v965 = vld [vmem:[#allocation5 + $0xce8] sm:$0xff]
    %v966 = vld [vmem:[#allocation5 + $0xcf0] sm:$0xff]
    %v967 = vld [vmem:[#allocation5 + $0xcf8] sm:$0xff]
    %v968 = vld [vmem:[#allocation5 + $0xd00] sm:$0xff]
    %v969 = vld [vmem:[#allocation5 + $0xd08] sm:$0xff]
    %v970 = vld [vmem:[#allocation5 + $0xd10] sm:$0xff]
    %v971 = vld [vmem:[#allocation5 + $0xd18] sm:$0xff]
    %v972 = vld [vmem:[#allocation5 + $0xd20] sm:$0xff]
    %v973 = vld [vmem:[#allocation5 + $0xd28] sm:$0xff]
    %v974 = vld [vmem:[#allocation5 + $0xd30] sm:$0xff]
    %v975 = vld [vmem:[#allocation5 + $0xd38] sm:$0xff]
    %v976 = vld [vmem:[#allocation5 + $0xd40] sm:$0xff]
    %v977 = vld [vmem:[#allocation5 + $0xd48] sm:$0xff]
    %v978 = vld [vmem:[#allocation5 + $0xd50] sm:$0xff]
    %v979 = vld [vmem:[#allocation5 + $0xd58] sm:$0xff]
    %v980 = vld [vmem:[#allocation5 + $0xd60] sm:$0xff]
    %v981 = vld [vmem:[#allocation5 + $0xd68] sm:$0xff]
    %v982 = vld [vmem:[#allocation5 + $0xd70] sm:$0xff]
    %v983 = vld [vmem:[#allocation5 + $0xd78] sm:$0xff]
    %v984 = vld [vmem:[#allocation5 + $0xd80] sm:$0xff]
    %v985 = vld [vmem:[#allocation5 + $0xd88] sm:$0xff]
    %v986 = vld [vmem:[#allocation5 + $0xd90] sm:$0xff]
    %v987 = vld [vmem:[#allocation5 + $0xd98] sm:$0xff]
    %v988 = vld [vmem:[#allocation5 + $0xda0] sm:$0xff]
    %v989 = vld [vmem:[#allocation5 + $0xda8] sm:$0xff]
    %v990 = vld [vmem:[#allocation5 + $0xdb0] sm:$0xff]
    %v991 = vld [vmem:[#allocation5 + $0xdb8] sm:$0xff]
    %v992 = vld [vmem:[#allocation5 + $0xdc0] sm:$0xff]
    %v993 = vld [vmem:[#allocation5 + $0xdc8] sm:$0xff]
    %v994 = vld [vmem:[#allocation5 + $0xdd0] sm:$0xff]
    %v995 = vld [vmem:[#allocation5 + $0xdd8] sm:$0xff]
    %v996 = vld [vmem:[#allocation5 + $0xde0] sm:$0xff]
    %v997 = vld [vmem:[#allocation5 + $0xde8] sm:$0xff]
    %v998 = vld [vmem:[#allocation5 + $0xdf0] sm:$0xff]
    %v999 = vld [vmem:[#allocation5 + $0xdf8] sm:$0xff]
    %v1000 = vld [vmem:[#allocation5 + $0xe00] sm:$0xff]
    %v1001 = vld [vmem:[#allocation5 + $0xe08] sm:$0xff]
    %v1002 = vld [vmem:[#allocation5 + $0xe10] sm:$0xff]
    %v1003 = vld [vmem:[#allocation5 + $0xe18] sm:$0xff]
    %v1004 = vld [vmem:[#allocation5 + $0xe20] sm:$0xff]
    %v1005 = vld [vmem:[#allocation5 + $0xe28] sm:$0xff]
    %v1006 = vld [vmem:[#allocation5 + $0xe30] sm:$0xff]
    %v1007 = vld [vmem:[#allocation5 + $0xe38] sm:$0xff]
    %v1008 = vld [vmem:[#allocation5 + $0xe40] sm:$0xff]
    %v1009 = vld [vmem:[#allocation5 + $0xe48] sm:$0xff]
    %v1010 = vld [vmem:[#allocation5 + $0xe50] sm:$0xff]
    %v1011 = vld [vmem:[#allocation5 + $0xe58] sm:$0xff]
    %v1012 = vld [vmem:[#allocation5 + $0xe60] sm:$0xff]
    %v1013 = vld [vmem:[#allocation5 + $0xe68] sm:$0xff]
    %v1014 = vld [vmem:[#allocation5 + $0xe70] sm:$0xff]
    %v1015 = vld [vmem:[#allocation5 + $0xe78] sm:$0xff]
    %v1016 = vld [vmem:[#allocation5 + $0xe80] sm:$0xff]
    %v1017 = vld [vmem:[#allocation5 + $0xe88] sm:$0xff]
    %v1018 = vld [vmem:[#allocation5 + $0xe90] sm:$0xff]
    %v1019 = vld [vmem:[#allocation5 + $0xe98] sm:$0xff]
    %v1020 = vld [vmem:[#allocation5 + $0xea0] sm:$0xff]
    %v1021 = vld [vmem:[#allocation5 + $0xea8] sm:$0xff]
    %v1022 = vld [vmem:[#allocation5 + $0xeb0] sm:$0xff]
    %v1023 = vld [vmem:[#allocation5 + $0xeb8] sm:$0xff]
    %v1024 = vld [vmem:[#allocation5 + $0xec0] sm:$0xff]
    %v1025 = vld [vmem:[#allocation5 + $0xec8] sm:$0xff]
    %v1026 = vld [vmem:[#allocation5 + $0xed0] sm:$0xff]
    %v1027 = vld [vmem:[#allocation5 + $0xed8] sm:$0xff]
    %v1028 = vld [vmem:[#allocation5 + $0xee0] sm:$0xff]
    %v1029 = vld [vmem:[#allocation5 + $0xee8] sm:$0xff]
    %v1030 = vld [vmem:[#allocation5 + $0xef0] sm:$0xff]
    %v1031 = vld [vmem:[#allocation5 + $0xef8] sm:$0xff]
    %v1032 = vld [vmem:[#allocation5 + $0xf00] sm:$0xff]
    %v1033 = vld [vmem:[#allocation5 + $0xf08] sm:$0xff]
    %v1034 = vld [vmem:[#allocation5 + $0xf10] sm:$0xff]
    %v1035 = vld [vmem:[#allocation5 + $0xf18] sm:$0xff]
    %v1036 = vld [vmem:[#allocation5 + $0xf20] sm:$0xff]
    %v1037 = vld [vmem:[#allocation5 + $0xf28] sm:$0xff]
    %v1038 = vld [vmem:[#allocation5 + $0xf30] sm:$0xff]
    %v1039 = vld [vmem:[#allocation5 + $0xf38] sm:$0xff]
    %v1040 = vld [vmem:[#allocation5 + $0xf40] sm:$0xff]
    %v1041 = vld [vmem:[#allocation5 + $0xf48] sm:$0xff]
    %v1042 = vld [vmem:[#allocation5 + $0xf50] sm:$0xff]
    %v1043 = vld [vmem:[#allocation5 + $0xf58] sm:$0xff]
    %v1044 = vld [vmem:[#allocation5 + $0xf60] sm:$0xff]
    %v1045 = vld [vmem:[#allocation5 + $0xf68] sm:$0xff]
    %v1046 = vld [vmem:[#allocation5 + $0xf70] sm:$0xff]
    %v1047 = vld [vmem:[#allocation5 + $0xf78] sm:$0xff]
    %v1048 = vld [vmem:[#allocation5 + $0xf80] sm:$0xff]
    %v1049 = vld [vmem:[#allocation5 + $0xf88] sm:$0xff]
    %v1050 = vld [vmem:[#allocation5 + $0xf90] sm:$0xff]
    %v1051 = vld [vmem:[#allocation5 + $0xf98] sm:$0xff]
    %v1052 = vld [vmem:[#allocation5 + $0xfa0] sm:$0xff]
    %v1053 = vld [vmem:[#allocation5 + $0xfa8] sm:$0xff]
    %v1054 = vld [vmem:[#allocation5 + $0xfb0] sm:$0xff]
    %v1055 = vld [vmem:[#allocation5 + $0xfb8] sm:$0xff]
    %v1056 = vld [vmem:[#allocation5 + $0xfc0] sm:$0xff]
    %v1057 = vld [vmem:[#allocation5 + $0xfc8] sm:$0xff]
    %v1058 = vld [vmem:[#allocation5 + $0xfd0] sm:$0xff]
    %v1059 = vld [vmem:[#allocation5 + $0xfd8] sm:$0xff]
    %v1060 = vld [vmem:[#allocation5 + $0xfe0] sm:$0xff]
    %v1061 = vld [vmem:[#allocation5 + $0xfe8] sm:$0xff]
    %v1062 = vld [vmem:[#allocation5 + $0xff0] sm:$0xff]
    %v1063 = vld [vmem:[#allocation5 + $0xff8] sm:$0xff]
    %v1064 = vsub.f32 %v40, %v552
    %v1065 = vsub.f32 %v41, %v553
    %v1066 = vsub.f32 %v42, %v554
    %v1067 = vsub.f32 %v43, %v555
    %v1068 = vsub.f32 %v44, %v556
    %v1069 = vsub.f32 %v45, %v557
    %v1070 = vsub.f32 %v46, %v558
    %v1071 = vsub.f32 %v47, %v559
    %v1072 = vsub.f32 %v48, %v560
    %v1073 = vsub.f32 %v49, %v561
    %v1074 = vsub.f32 %v50, %v562
    %v1075 = vsub.f32 %v51, %v563
    %v1076 = vsub.f32 %v52, %v564
    %v1077 = vsub.f32 %v53, %v565
    %v1078 = vsub.f32 %v54, %v566
    %v1079 = vsub.f32 %v55, %v567
    %v1080 = vsub.f32 %v56, %v568
    %v1081 = vsub.f32 %v57, %v569
    %v1082 = vsub.f32 %v58, %v570
    %v1083 = vsub.f32 %v59, %v571
    %v1084 = vsub.f32 %v60, %v572
    %v1085 = vsub.f32 %v61, %v573
    %v1086 = vsub.f32 %v62, %v574
    %v1087 = vsub.f32 %v63, %v575
    %v1088 = vsub.f32 %v64, %v576
    %v1089 = vsub.f32 %v65, %v577
    %v1090 = vsub.f32 %v66, %v578
    %v1091 = vsub.f32 %v67, %v579
    %v1092 = vsub.f32 %v68, %v580
    %v1093 = vsub.f32 %v69, %v581
    %v1094 = vsub.f32 %v70, %v582
    %v1095 = vsub.f32 %v71, %v583
    %v1096 = vsub.f32 %v72, %v584
    %v1097 = vsub.f32 %v73, %v585
    %v1098 = vsub.f32 %v74, %v586
    %v1099 = vsub.f32 %v75, %v587
    %v1100 = vsub.f32 %v76, %v588
    %v1101 = vsub.f32 %v77, %v589
    %v1102 = vsub.f32 %v78, %v590
    %v1103 = vsub.f32 %v79, %v591
    %v1104 = vsub.f32 %v80, %v592
    %v1105 = vsub.f32 %v81, %v593
    %v1106 = vsub.f32 %v82, %v594
    %v1107 = vsub.f32 %v83, %v595
    %v1108 = vsub.f32 %v84, %v596
    %v1109 = vsub.f32 %v85, %v597
    %v1110 = vsub.f32 %v86, %v598
    %v1111 = vsub.f32 %v87, %v599
    %v1112 = vsub.f32 %v88, %v600
    %v1113 = vsub.f32 %v89, %v601
    %v1114 = vsub.f32 %v90, %v602
    %v1115 = vsub.f32 %v91, %v603
    %v1116 = vsub.f32 %v92, %v604
    %v1117 = vsub.f32 %v93, %v605
    %v1118 = vsub.f32 %v94, %v606
    %v1119 = vsub.f32 %v95, %v607
    %v1120 = vsub.f32 %v96, %v608
    %v1121 = vsub.f32 %v97, %v609
    %v1122 = vsub.f32 %v98, %v610
    %v1123 = vsub.f32 %v99, %v611
    %v1124 = vsub.f32 %v100, %v612
    %v1125 = vsub.f32 %v101, %v613
    %v1126 = vsub.f32 %v102, %v614
    %v1127 = vsub.f32 %v103, %v615
    %v1128 = vsub.f32 %v104, %v616
    %v1129 = vsub.f32 %v105, %v617
    %v1130 = vsub.f32 %v106, %v618
    %v1131 = vsub.f32 %v107, %v619
    %v1132 = vsub.f32 %v108, %v620
    %v1133 = vsub.f32 %v109, %v621
    %v1134 = vsub.f32 %v110, %v622
    %v1135 = vsub.f32 %v111, %v623
    %v1136 = vsub.f32 %v112, %v624
    %v1137 = vsub.f32 %v113, %v625
    %v1138 = vsub.f32 %v114, %v626
    %v1139 = vsub.f32 %v115, %v627
    %v1140 = vsub.f32 %v116, %v628
    %v1141 = vsub.f32 %v117, %v629
    %v1142 = vsub.f32 %v118, %v630
    %v1143 = vsub.f32 %v119, %v631
    %v1144 = vsub.f32 %v120, %v632
    %v1145 = vsub.f32 %v121, %v633
    %v1146 = vsub.f32 %v122, %v634
    %v1147 = vsub.f32 %v123, %v635
    %v1148 = vsub.f32 %v124, %v636
    %v1149 = vsub.f32 %v125, %v637
    %v1150 = vsub.f32 %v126, %v638
    %v1151 = vsub.f32 %v127, %v639
    %v1152 = vsub.f32 %v128, %v640
    %v1153 = vsub.f32 %v129, %v641
    %v1154 = vsub.f32 %v130, %v642
    %v1155 = vsub.f32 %v131, %v643
    %v1156 = vsub.f32 %v132, %v644
    %v1157 = vsub.f32 %v133, %v645
    %v1158 = vsub.f32 %v134, %v646
    %v1159 = vsub.f32 %v135, %v647
    %v1160 = vsub.f32 %v136, %v648
    %v1161 = vsub.f32 %v137, %v649
    %v1162 = vsub.f32 %v138, %v650
    %v1163 = vsub.f32 %v139, %v651
    %v1164 = vsub.f32 %v140, %v652
    %v1165 = vsub.f32 %v141, %v653
    %v1166 = vsub.f32 %v142, %v654
    %v1167 = vsub.f32 %v143, %v655
    %v1168 = vsub.f32 %v144, %v656
    %v1169 = vsub.f32 %v145, %v657
    %v1170 = vsub.f32 %v146, %v658
    %v1171 = vsub.f32 %v147, %v659
    %v1172 = vsub.f32 %v148, %v660
    %v1173 = vsub.f32 %v149, %v661
    %v1174 = vsub.f32 %v150, %v662
    %v1175 = vsub.f32 %v151, %v663
    %v1176 = vsub.f32 %v152, %v664
    %v1177 = vsub.f32 %v153, %v665
    %v1178 = vsub.f32 %v154, %v666
    %v1179 = vsub.f32 %v155, %v667
    %v1180 = vsub.f32 %v156, %v668
    %v1181 = vsub.f32 %v157, %v669
    %v1182 = vsub.f32 %v158, %v670
    %v1183 = vsub.f32 %v159, %v671
    %v1184 = vsub.f32 %v160, %v672
    %v1185 = vsub.f32 %v161, %v673
    %v1186 = vsub.f32 %v162, %v674
    %v1187 = vsub.f32 %v163, %v675
    %v1188 = vsub.f32 %v164, %v676
    %v1189 = vsub.f32 %v165, %v677
    %v1190 = vsub.f32 %v166, %v678
    %v1191 = vsub.f32 %v167, %v679
    %v1192 = vsub.f32 %v168, %v680
    %v1193 = vsub.f32 %v169, %v681
    %v1194 = vsub.f32 %v170, %v682
    %v1195 = vsub.f32 %v171, %v683
    %v1196 = vsub.f32 %v172, %v684
    %v1197 = vsub.f32 %v173, %v685
    %v1198 = vsub.f32 %v174, %v686
    %v1199 = vsub.f32 %v175, %v687
    %v1200 = vsub.f32 %v176, %v688
    %v1201 = vsub.f32 %v177, %v689
    %v1202 = vsub.f32 %v178, %v690
    %v1203 = vsub.f32 %v179, %v691
    %v1204 = vsub.f32 %v180, %v692
    %v1205 = vsub.f32 %v181, %v693
    %v1206 = vsub.f32 %v182, %v694
    %v1207 = vsub.f32 %v183, %v695
    %v1208 = vsub.f32 %v184, %v696
    %v1209 = vsub.f32 %v185, %v697
    %v1210 = vsub.f32 %v186, %v698
    %v1211 = vsub.f32 %v187, %v699
    %v1212 = vsub.f32 %v188, %v700
    %v1213 = vsub.f32 %v189, %v701
    %v1214 = vsub.f32 %v190, %v702
    %v1215 = vsub.f32 %v191, %v703
    %v1216 = vsub.f32 %v192, %v704
    %v1217 = vsub.f32 %v193, %v705
    %v1218 = vsub.f32 %v194, %v706
    %v1219 = vsub.f32 %v195, %v707
    %v1220 = vsub.f32 %v196, %v708
    %v1221 = vsub.f32 %v197, %v709
    %v1222 = vsub.f32 %v198, %v710
    %v1223 = vsub.f32 %v199, %v711
    %v1224 = vsub.f32 %v200, %v712
    %v1225 = vsub.f32 %v201, %v713
    %v1226 = vsub.f32 %v202, %v714
    %v1227 = vsub.f32 %v203, %v715
    %v1228 = vsub.f32 %v204, %v716
    %v1229 = vsub.f32 %v205, %v717
    %v1230 = vsub.f32 %v206, %v718
    %v1231 = vsub.f32 %v207, %v719
    %v1232 = vsub.f32 %v208, %v720
    %v1233 = vsub.f32 %v209, %v721
    %v1234 = vsub.f32 %v210, %v722
    %v1235 = vsub.f32 %v211, %v723
    %v1236 = vsub.f32 %v212, %v724
    %v1237 = vsub.f32 %v213, %v725
    %v1238 = vsub.f32 %v214, %v726
    %v1239 = vsub.f32 %v215, %v727
    %v1240 = vsub.f32 %v216, %v728
    %v1241 = vsub.f32 %v217, %v729
    %v1242 = vsub.f32 %v218, %v730
    %v1243 = vsub.f32 %v219, %v731
    %v1244 = vsub.f32 %v220, %v732
    %v1245 = vsub.f32 %v221, %v733
    %v1246 = vsub.f32 %v222, %v734
    %v1247 = vsub.f32 %v223, %v735
    %v1248 = vsub.f32 %v224, %v736
    %v1249 = vsub.f32 %v225, %v737
    %v1250 = vsub.f32 %v226, %v738
    %v1251 = vsub.f32 %v227, %v739
    %v1252 = vsub.f32 %v228, %v740
    %v1253 = vsub.f32 %v229, %v741
    %v1254 = vsub.f32 %v230, %v742
    %v1255 = vsub.f32 %v231, %v743
    %v1256 = vsub.f32 %v232, %v744
    %v1257 = vsub.f32 %v233, %v745
    %v1258 = vsub.f32 %v234, %v746
    %v1259 = vsub.f32 %v235, %v747
    %v1260 = vsub.f32 %v236, %v748
    %v1261 = vsub.f32 %v237, %v749
    %v1262 = vsub.f32 %v238, %v750
    %v1263 = vsub.f32 %v239, %v751
    %v1264 = vsub.f32 %v240, %v752
    %v1265 = vsub.f32 %v241, %v753
    %v1266 = vsub.f32 %v242, %v754
    %v1267 = vsub.f32 %v243, %v755
    %v1268 = vsub.f32 %v244, %v756
    %v1269 = vsub.f32 %v245, %v757
    %v1270 = vsub.f32 %v246, %v758
    %v1271 = vsub.f32 %v247, %v759
    %v1272 = vsub.f32 %v248, %v760
    %v1273 = vsub.f32 %v249, %v761
    %v1274 = vsub.f32 %v250, %v762
    %v1275 = vsub.f32 %v251, %v763
    %v1276 = vsub.f32 %v252, %v764
    %v1277 = vsub.f32 %v253, %v765
    %v1278 = vsub.f32 %v254, %v766
    %v1279 = vsub.f32 %v255, %v767
    %v1280 = vsub.f32 %v256, %v768
    %v1281 = vsub.f32 %v257, %v769
    %v1282 = vsub.f32 %v258, %v770
    %v1283 = vsub.f32 %v259, %v771
    %v1284 = vsub.f32 %v260, %v772
    %v1285 = vsub.f32 %v261, %v773
    %v1286 = vsub.f32 %v262, %v774
    %v1287 = vsub.f32 %v263, %v775
    %v1288 = vsub.f32 %v264, %v776
    %v1289 = vsub.f32 %v265, %v777
    %v1290 = vsub.f32 %v266, %v778
    %v1291 = vsub.f32 %v267, %v779
    %v1292 = vsub.f32 %v268, %v780
    %v1293 = vsub.f32 %v269, %v781
    %v1294 = vsub.f32 %v270, %v782
    %v1295 = vsub.f32 %v271, %v783
    %v1296 = vsub.f32 %v272, %v784
    %v1297 = vsub.f32 %v273, %v785
    %v1298 = vsub.f32 %v274, %v786
    %v1299 = vsub.f32 %v275, %v787
    %v1300 = vsub.f32 %v276, %v788
    %v1301 = vsub.f32 %v277, %v789
    %v1302 = vsub.f32 %v278, %v790
    %v1303 = vsub.f32 %v279, %v791
    %v1304 = vsub.f32 %v280, %v792
    %v1305 = vsub.f32 %v281, %v793
    %v1306 = vsub.f32 %v282, %v794
    %v1307 = vsub.f32 %v283, %v795
    %v1308 = vsub.f32 %v284, %v796
    %v1309 = vsub.f32 %v285, %v797
    %v1310 = vsub.f32 %v286, %v798
    %v1311 = vsub.f32 %v287, %v799
    %v1312 = vsub.f32 %v288, %v800
    %v1313 = vsub.f32 %v289, %v801
    %v1314 = vsub.f32 %v290, %v802
    %v1315 = vsub.f32 %v291, %v803
    %v1316 = vsub.f32 %v292, %v804
    %v1317 = vsub.f32 %v293, %v805
    %v1318 = vsub.f32 %v294, %v806
    %v1319 = vsub.f32 %v295, %v807
    %v1320 = vsub.f32 %v296, %v808
    %v1321 = vsub.f32 %v297, %v809
    %v1322 = vsub.f32 %v298, %v810
    %v1323 = vsub.f32 %v299, %v811
    %v1324 = vsub.f32 %v300, %v812
    %v1325 = vsub.f32 %v301, %v813
    %v1326 = vsub.f32 %v302, %v814
    %v1327 = vsub.f32 %v303, %v815
    %v1328 = vsub.f32 %v304, %v816
    %v1329 = vsub.f32 %v305, %v817
    %v1330 = vsub.f32 %v306, %v818
    %v1331 = vsub.f32 %v307, %v819
    %v1332 = vsub.f32 %v308, %v820
    %v1333 = vsub.f32 %v309, %v821
    %v1334 = vsub.f32 %v310, %v822
    %v1335 = vsub.f32 %v311, %v823
    %v1336 = vsub.f32 %v312, %v824
    %v1337 = vsub.f32 %v313, %v825
    %v1338 = vsub.f32 %v314, %v826
    %v1339 = vsub.f32 %v315, %v827
    %v1340 = vsub.f32 %v316, %v828
    %v1341 = vsub.f32 %v317, %v829
    %v1342 = vsub.f32 %v318, %v830
    %v1343 = vsub.f32 %v319, %v831
    %v1344 = vsub.f32 %v320, %v832
    %v1345 = vsub.f32 %v321, %v833
    %v1346 = vsub.f32 %v322, %v834
    %v1347 = vsub.f32 %v323, %v835
    %v1348 = vsub.f32 %v324, %v836
    %v1349 = vsub.f32 %v325, %v837
    %v1350 = vsub.f32 %v326, %v838
    %v1351 = vsub.f32 %v327, %v839
    %v1352 = vsub.f32 %v328, %v840
    %v1353 = vsub.f32 %v329, %v841
    %v1354 = vsub.f32 %v330, %v842
    %v1355 = vsub.f32 %v331, %v843
    %v1356 = vsub.f32 %v332, %v844
    %v1357 = vsub.f32 %v333, %v845
    %v1358 = vsub.f32 %v334, %v846
    %v1359 = vsub.f32 %v335, %v847
    %v1360 = vsub.f32 %v336, %v848
    %v1361 = vsub.f32 %v337, %v849
    %v1362 = vsub.f32 %v338, %v850
    %v1363 = vsub.f32 %v339, %v851
    %v1364 = vsub.f32 %v340, %v852
    %v1365 = vsub.f32 %v341, %v853
    %v1366 = vsub.f32 %v342, %v854
    %v1367 = vsub.f32 %v343, %v855
    %v1368 = vsub.f32 %v344, %v856
    %v1369 = vsub.f32 %v345, %v857
    %v1370 = vsub.f32 %v346, %v858
    %v1371 = vsub.f32 %v347, %v859
    %v1372 = vsub.f32 %v348, %v860
    %v1373 = vsub.f32 %v349, %v861
    %v1374 = vsub.f32 %v350, %v862
    %v1375 = vsub.f32 %v351, %v863
    %v1376 = vsub.f32 %v352, %v864
    %v1377 = vsub.f32 %v353, %v865
    %v1378 = vsub.f32 %v354, %v866
    %v1379 = vsub.f32 %v355, %v867
    %v1380 = vsub.f32 %v356, %v868
    %v1381 = vsub.f32 %v357, %v869
    %v1382 = vsub.f32 %v358, %v870
    %v1383 = vsub.f32 %v359, %v871
    %v1384 = vsub.f32 %v360, %v872
    %v1385 = vsub.f32 %v361, %v873
    %v1386 = vsub.f32 %v362, %v874
    %v1387 = vsub.f32 %v363, %v875
    %v1388 = vsub.f32 %v364, %v876
    %v1389 = vsub.f32 %v365, %v877
    %v1390 = vsub.f32 %v366, %v878
    %v1391 = vsub.f32 %v367, %v879
    %v1392 = vsub.f32 %v368, %v880
    %v1393 = vsub.f32 %v369, %v881
    %v1394 = vsub.f32 %v370, %v882
    %v1395 = vsub.f32 %v371, %v883
    %v1396 = vsub.f32 %v372, %v884
    %v1397 = vsub.f32 %v373, %v885
    %v1398 = vsub.f32 %v374, %v886
    %v1399 = vsub.f32 %v375, %v887
    %v1400 = vsub.f32 %v376, %v888
    %v1401 = vsub.f32 %v377, %v889
    %v1402 = vsub.f32 %v378, %v890
    %v1403 = vsub.f32 %v379, %v891
    %v1404 = vsub.f32 %v380, %v892
    %v1405 = vsub.f32 %v381, %v893
    %v1406 = vsub.f32 %v382, %v894
    %v1407 = vsub.f32 %v383, %v895
    %v1408 = vsub.f32 %v384, %v896
    %v1409 = vsub.f32 %v385, %v897
    %v1410 = vsub.f32 %v386, %v898
    %v1411 = vsub.f32 %v387, %v899
    %v1412 = vsub.f32 %v388, %v900
    %v1413 = vsub.f32 %v389, %v901
    %v1414 = vsub.f32 %v390, %v902
    %v1415 = vsub.f32 %v391, %v903
    %v1416 = vsub.f32 %v392, %v904
    %v1417 = vsub.f32 %v393, %v905
    %v1418 = vsub.f32 %v394, %v906
    %v1419 = vsub.f32 %v395, %v907
    %v1420 = vsub.f32 %v396, %v908
    %v1421 = vsub.f32 %v397, %v909
    %v1422 = vsub.f32 %v398, %v910
    %v1423 = vsub.f32 %v399, %v911
    %v1424 = vsub.f32 %v400, %v912
    %v1425 = vsub.f32 %v401, %v913
    %v1426 = vsub.f32 %v402, %v914
    %v1427 = vsub.f32 %v403, %v915
    %v1428 = vsub.f32 %v404, %v916
    %v1429 = vsub.f32 %v405, %v917
    %v1430 = vsub.f32 %v406, %v918
    %v1431 = vsub.f32 %v407, %v919
    %v1432 = vsub.f32 %v408, %v920
    %v1433 = vsub.f32 %v409, %v921
    %v1434 = vsub.f32 %v410, %v922
    %v1435 = vsub.f32 %v411, %v923
    %v1436 = vsub.f32 %v412, %v924
    %v1437 = vsub.f32 %v413, %v925
    %v1438 = vsub.f32 %v414, %v926
    %v1439 = vsub.f32 %v415, %v927
    %v1440 = vsub.f32 %v416, %v928
    %v1441 = vsub.f32 %v417, %v929
    %v1442 = vsub.f32 %v418, %v930
    %v1443 = vsub.f32 %v419, %v931
    %v1444 = vsub.f32 %v420, %v932
    %v1445 = vsub.f32 %v421, %v933
    %v1446 = vsub.f32 %v422, %v934
    %v1447 = vsub.f32 %v423, %v935
    %v1448 = vsub.f32 %v424, %v936
    %v1449 = vsub.f32 %v425, %v937
    %v1450 = vsub.f32 %v426, %v938
    %v1451 = vsub.f32 %v427, %v939
    %v1452 = vsub.f32 %v428, %v940
    %v1453 = vsub.f32 %v429, %v941
    %v1454 = vsub.f32 %v430, %v942
    %v1455 = vsub.f32 %v431, %v943
    %v1456 = vsub.f32 %v432, %v944
    %v1457 = vsub.f32 %v433, %v945
    %v1458 = vsub.f32 %v434, %v946
    %v1459 = vsub.f32 %v435, %v947
    %v1460 = vsub.f32 %v436, %v948
    %v1461 = vsub.f32 %v437, %v949
    %v1462 = vsub.f32 %v438, %v950
    %v1463 = vsub.f32 %v439, %v951
    %v1464 = vsub.f32 %v440, %v952
    %v1465 = vsub.f32 %v441, %v953
    %v1466 = vsub.f32 %v442, %v954
    %v1467 = vsub.f32 %v443, %v955
    %v1468 = vsub.f32 %v444, %v956
    %v1469 = vsub.f32 %v445, %v957
    %v1470 = vsub.f32 %v446, %v958
    %v1471 = vsub.f32 %v447, %v959
    %v1472 = vsub.f32 %v448, %v960
    %v1473 = vsub.f32 %v449, %v961
    %v1474 = vsub.f32 %v450, %v962
    %v1475 = vsub.f32 %v451, %v963
    %v1476 = vsub.f32 %v452, %v964
    %v1477 = vsub.f32 %v453, %v965
    %v1478 = vsub.f32 %v454, %v966
    %v1479 = vsub.f32 %v455, %v967
    %v1480 = vsub.f32 %v456, %v968
    %v1481 = vsub.f32 %v457, %v969
    %v1482 = vsub.f32 %v458, %v970
    %v1483 = vsub.f32 %v459, %v971
    %v1484 = vsub.f32 %v460, %v972
    %v1485 = vsub.f32 %v461, %v973
    %v1486 = vsub.f32 %v462, %v974
    %v1487 = vsub.f32 %v463, %v975
    %v1488 = vsub.f32 %v464, %v976
    %v1489 = vsub.f32 %v465, %v977
    %v1490 = vsub.f32 %v466, %v978
    %v1491 = vsub.f32 %v467, %v979
    %v1492 = vsub.f32 %v468, %v980
    %v1493 = vsub.f32 %v469, %v981
    %v1494 = vsub.f32 %v470, %v982
    %v1495 = vsub.f32 %v471, %v983
    %v1496 = vsub.f32 %v472, %v984
    %v1497 = vsub.f32 %v473, %v985
    %v1498 = vsub.f32 %v474, %v986
    %v1499 = vsub.f32 %v475, %v987
    %v1500 = vsub.f32 %v476, %v988
    %v1501 = vsub.f32 %v477, %v989
    %v1502 = vsub.f32 %v478, %v990
    %v1503 = vsub.f32 %v479, %v991
    %v1504 = vsub.f32 %v480, %v992
    %v1505 = vsub.f32 %v481, %v993
    %v1506 = vsub.f32 %v482, %v994
    %v1507 = vsub.f32 %v483, %v995
    %v1508 = vsub.f32 %v484, %v996
    %v1509 = vsub.f32 %v485, %v997
    %v1510 = vsub.f32 %v486, %v998
    %v1511 = vsub.f32 %v487, %v999
    %v1512 = vsub.f32 %v488, %v1000
    %v1513 = vsub.f32 %v489, %v1001
    %v1514 = vsub.f32 %v490, %v1002
    %v1515 = vsub.f32 %v491, %v1003
    %v1516 = vsub.f32 %v492, %v1004
    %v1517 = vsub.f32 %v493, %v1005
    %v1518 = vsub.f32 %v494, %v1006
    %v1519 = vsub.f32 %v495, %v1007
    %v1520 = vsub.f32 %v496, %v1008
    %v1521 = vsub.f32 %v497, %v1009
    %v1522 = vsub.f32 %v498, %v1010
    %v1523 = vsub.f32 %v499, %v1011
    %v1524 = vsub.f32 %v500, %v1012
    %v1525 = vsub.f32 %v501, %v1013
    %v1526 = vsub.f32 %v502, %v1014
    %v1527 = vsub.f32 %v503, %v1015
    %v1528 = vsub.f32 %v504, %v1016
    %v1529 = vsub.f32 %v505, %v1017
    %v1530 = vsub.f32 %v506, %v1018
    %v1531 = vsub.f32 %v507, %v1019
    %v1532 = vsub.f32 %v508, %v1020
    %v1533 = vsub.f32 %v509, %v1021
    %v1534 = vsub.f32 %v510, %v1022
    %v1535 = vsub.f32 %v511, %v1023
    %v1536 = vsub.f32 %v512, %v1024
    %v1537 = vsub.f32 %v513, %v1025
    %v1538 = vsub.f32 %v514, %v1026
    %v1539 = vsub.f32 %v515, %v1027
    %v1540 = vsub.f32 %v516, %v1028
    %v1541 = vsub.f32 %v517, %v1029
    %v1542 = vsub.f32 %v518, %v1030
    %v1543 = vsub.f32 %v519, %v1031
    %v1544 = vsub.f32 %v520, %v1032
    %v1545 = vsub.f32 %v521, %v1033
    %v1546 = vsub.f32 %v522, %v1034
    %v1547 = vsub.f32 %v523, %v1035
    %v1548 = vsub.f32 %v524, %v1036
    %v1549 = vsub.f32 %v525, %v1037
    %v1550 = vsub.f32 %v526, %v1038
    %v1551 = vsub.f32 %v527, %v1039
    %v1552 = vsub.f32 %v528, %v1040
    %v1553 = vsub.f32 %v529, %v1041
    %v1554 = vsub.f32 %v530, %v1042
    %v1555 = vsub.f32 %v531, %v1043
    %v1556 = vsub.f32 %v532, %v1044
    %v1557 = vsub.f32 %v533, %v1045
    %v1558 = vsub.f32 %v534, %v1046
    %v1559 = vsub.f32 %v535, %v1047
    %v1560 = vsub.f32 %v536, %v1048
    %v1561 = vsub.f32 %v537, %v1049
    %v1562 = vsub.f32 %v538, %v1050
    %v1563 = vsub.f32 %v539, %v1051
    %v1564 = vsub.f32 %v540, %v1052
    %v1565 = vsub.f32 %v541, %v1053
    %v1566 = vsub.f32 %v542, %v1054
    %v1567 = vsub.f32 %v543, %v1055
    %v1568 = vsub.f32 %v544, %v1056
    %v1569 = vsub.f32 %v545, %v1057
    %v1570 = vsub.f32 %v546, %v1058
    %v1571 = vsub.f32 %v547, %v1059
    %v1572 = vsub.f32 %v548, %v1060
    %v1573 = vsub.f32 %v549, %v1061
    %v1574 = vsub.f32 %v550, %v1062
    %v1575 = vsub.f32 %v551, %v1063
    %v1576 = vmul.f32 %v1064, %v1064
    %v1577 = vmul.f32 %v1065, %v1065
    %v1578 = vmul.f32 %v1066, %v1066
    %v1579 = vmul.f32 %v1067, %v1067
    %v1580 = vmul.f32 %v1068, %v1068
    %v1581 = vmul.f32 %v1069, %v1069
    %v1582 = vmul.f32 %v1070, %v1070
    %v1583 = vmul.f32 %v1071, %v1071
    %v1584 = vmul.f32 %v1072, %v1072
    %v1585 = vmul.f32 %v1073, %v1073
    %v1586 = vmul.f32 %v1074, %v1074
    %v1587 = vmul.f32 %v1075, %v1075
    %v1588 = vmul.f32 %v1076, %v1076
    %v1589 = vmul.f32 %v1077, %v1077
    %v1590 = vmul.f32 %v1078, %v1078
    %v1591 = vmul.f32 %v1079, %v1079
    %v1592 = vmul.f32 %v1080, %v1080
    %v1593 = vmul.f32 %v1081, %v1081
    %v1594 = vmul.f32 %v1082, %v1082
    %v1595 = vmul.f32 %v1083, %v1083
    %v1596 = vmul.f32 %v1084, %v1084
    %v1597 = vmul.f32 %v1085, %v1085
    %v1598 = vmul.f32 %v1086, %v1086
    %v1599 = vmul.f32 %v1087, %v1087
    %v1600 = vmul.f32 %v1088, %v1088
    %v1601 = vmul.f32 %v1089, %v1089
    %v1602 = vmul.f32 %v1090, %v1090
    %v1603 = vmul.f32 %v1091, %v1091
    %v1604 = vmul.f32 %v1092, %v1092
    %v1605 = vmul.f32 %v1093, %v1093
    %v1606 = vmul.f32 %v1094, %v1094
    %v1607 = vmul.f32 %v1095, %v1095
    %v1608 = vmul.f32 %v1096, %v1096
    %v1609 = vmul.f32 %v1097, %v1097
    %v1610 = vmul.f32 %v1098, %v1098
    %v1611 = vmul.f32 %v1099, %v1099
    %v1612 = vmul.f32 %v1100, %v1100
    %v1613 = vmul.f32 %v1101, %v1101
    %v1614 = vmul.f32 %v1102, %v1102
    %v1615 = vmul.f32 %v1103, %v1103
    %v1616 = vmul.f32 %v1104, %v1104
    %v1617 = vmul.f32 %v1105, %v1105
    %v1618 = vmul.f32 %v1106, %v1106
    %v1619 = vmul.f32 %v1107, %v1107
    %v1620 = vmul.f32 %v1108, %v1108
    %v1621 = vmul.f32 %v1109, %v1109
    %v1622 = vmul.f32 %v1110, %v1110
    %v1623 = vmul.f32 %v1111, %v1111
    %v1624 = vmul.f32 %v1112, %v1112
    %v1625 = vmul.f32 %v1113, %v1113
    %v1626 = vmul.f32 %v1114, %v1114
    %v1627 = vmul.f32 %v1115, %v1115
    %v1628 = vmul.f32 %v1116, %v1116
    %v1629 = vmul.f32 %v1117, %v1117
    %v1630 = vmul.f32 %v1118, %v1118
    %v1631 = vmul.f32 %v1119, %v1119
    %v1632 = vmul.f32 %v1120, %v1120
    %v1633 = vmul.f32 %v1121, %v1121
    %v1634 = vmul.f32 %v1122, %v1122
    %v1635 = vmul.f32 %v1123, %v1123
    %v1636 = vmul.f32 %v1124, %v1124
    %v1637 = vmul.f32 %v1125, %v1125
    %v1638 = vmul.f32 %v1126, %v1126
    %v1639 = vmul.f32 %v1127, %v1127
    %v1640 = vmul.f32 %v1128, %v1128
    %v1641 = vmul.f32 %v1129, %v1129
    %v1642 = vmul.f32 %v1130, %v1130
    %v1643 = vmul.f32 %v1131, %v1131
    %v1644 = vmul.f32 %v1132, %v1132
    %v1645 = vmul.f32 %v1133, %v1133
    %v1646 = vmul.f32 %v1134, %v1134
    %v1647 = vmul.f32 %v1135, %v1135
    %v1648 = vmul.f32 %v1136, %v1136
    %v1649 = vmul.f32 %v1137, %v1137
    %v1650 = vmul.f32 %v1138, %v1138
    %v1651 = vmul.f32 %v1139, %v1139
    %v1652 = vmul.f32 %v1140, %v1140
    %v1653 = vmul.f32 %v1141, %v1141
    %v1654 = vmul.f32 %v1142, %v1142
    %v1655 = vmul.f32 %v1143, %v1143
    %v1656 = vmul.f32 %v1144, %v1144
    %v1657 = vmul.f32 %v1145, %v1145
    %v1658 = vmul.f32 %v1146, %v1146
    %v1659 = vmul.f32 %v1147, %v1147
    %v1660 = vmul.f32 %v1148, %v1148
    %v1661 = vmul.f32 %v1149, %v1149
    %v1662 = vmul.f32 %v1150, %v1150
    %v1663 = vmul.f32 %v1151, %v1151
    %v1664 = vmul.f32 %v1152, %v1152
    %v1665 = vmul.f32 %v1153, %v1153
    %v1666 = vmul.f32 %v1154, %v1154
    %v1667 = vmul.f32 %v1155, %v1155
    %v1668 = vmul.f32 %v1156, %v1156
    %v1669 = vmul.f32 %v1157, %v1157
    %v1670 = vmul.f32 %v1158, %v1158
    %v1671 = vmul.f32 %v1159, %v1159
    %v1672 = vmul.f32 %v1160, %v1160
    %v1673 = vmul.f32 %v1161, %v1161
    %v1674 = vmul.f32 %v1162, %v1162
    %v1675 = vmul.f32 %v1163, %v1163
    %v1676 = vmul.f32 %v1164, %v1164
    %v1677 = vmul.f32 %v1165, %v1165
    %v1678 = vmul.f32 %v1166, %v1166
    %v1679 = vmul.f32 %v1167, %v1167
    %v1680 = vmul.f32 %v1168, %v1168
    %v1681 = vmul.f32 %v1169, %v1169
    %v1682 = vmul.f32 %v1170, %v1170
    %v1683 = vmul.f32 %v1171, %v1171
    %v1684 = vmul.f32 %v1172, %v1172
    %v1685 = vmul.f32 %v1173, %v1173
    %v1686 = vmul.f32 %v1174, %v1174
    %v1687 = vmul.f32 %v1175, %v1175
    %v1688 = vmul.f32 %v1176, %v1176
    %v1689 = vmul.f32 %v1177, %v1177
    %v1690 = vmul.f32 %v1178, %v1178
    %v1691 = vmul.f32 %v1179, %v1179
    %v1692 = vmul.f32 %v1180, %v1180
    %v1693 = vmul.f32 %v1181, %v1181
    %v1694 = vmul.f32 %v1182, %v1182
    %v1695 = vmul.f32 %v1183, %v1183
    %v1696 = vmul.f32 %v1184, %v1184
    %v1697 = vmul.f32 %v1185, %v1185
    %v1698 = vmul.f32 %v1186, %v1186
    %v1699 = vmul.f32 %v1187, %v1187
    %v1700 = vmul.f32 %v1188, %v1188
    %v1701 = vmul.f32 %v1189, %v1189
    %v1702 = vmul.f32 %v1190, %v1190
    %v1703 = vmul.f32 %v1191, %v1191
    %v1704 = vmul.f32 %v1192, %v1192
    %v1705 = vmul.f32 %v1193, %v1193
    %v1706 = vmul.f32 %v1194, %v1194
    %v1707 = vmul.f32 %v1195, %v1195
    %v1708 = vmul.f32 %v1196, %v1196
    %v1709 = vmul.f32 %v1197, %v1197
    %v1710 = vmul.f32 %v1198, %v1198
    %v1711 = vmul.f32 %v1199, %v1199
    %v1712 = vmul.f32 %v1200, %v1200
    %v1713 = vmul.f32 %v1201, %v1201
    %v1714 = vmul.f32 %v1202, %v1202
    %v1715 = vmul.f32 %v1203, %v1203
    %v1716 = vmul.f32 %v1204, %v1204
    %v1717 = vmul.f32 %v1205, %v1205
    %v1718 = vmul.f32 %v1206, %v1206
    %v1719 = vmul.f32 %v1207, %v1207
    %v1720 = vmul.f32 %v1208, %v1208
    %v1721 = vmul.f32 %v1209, %v1209
    %v1722 = vmul.f32 %v1210, %v1210
    %v1723 = vmul.f32 %v1211, %v1211
    %v1724 = vmul.f32 %v1212, %v1212
    %v1725 = vmul.f32 %v1213, %v1213
    %v1726 = vmul.f32 %v1214, %v1214
    %v1727 = vmul.f32 %v1215, %v1215
    %v1728 = vmul.f32 %v1216, %v1216
    %v1729 = vmul.f32 %v1217, %v1217
    %v1730 = vmul.f32 %v1218, %v1218
    %v1731 = vmul.f32 %v1219, %v1219
    %v1732 = vmul.f32 %v1220, %v1220
    %v1733 = vmul.f32 %v1221, %v1221
    %v1734 = vmul.f32 %v1222, %v1222
    %v1735 = vmul.f32 %v1223, %v1223
    %v1736 = vmul.f32 %v1224, %v1224
    %v1737 = vmul.f32 %v1225, %v1225
    %v1738 = vmul.f32 %v1226, %v1226
    %v1739 = vmul.f32 %v1227, %v1227
    %v1740 = vmul.f32 %v1228, %v1228
    %v1741 = vmul.f32 %v1229, %v1229
    %v1742 = vmul.f32 %v1230, %v1230
    %v1743 = vmul.f32 %v1231, %v1231
    %v1744 = vmul.f32 %v1232, %v1232
    %v1745 = vmul.f32 %v1233, %v1233
    %v1746 = vmul.f32 %v1234, %v1234
    %v1747 = vmul.f32 %v1235, %v1235
    %v1748 = vmul.f32 %v1236, %v1236
    %v1749 = vmul.f32 %v1237, %v1237
    %v1750 = vmul.f32 %v1238, %v1238
    %v1751 = vmul.f32 %v1239, %v1239
    %v1752 = vmul.f32 %v1240, %v1240
    %v1753 = vmul.f32 %v1241, %v1241
    %v1754 = vmul.f32 %v1242, %v1242
    %v1755 = vmul.f32 %v1243, %v1243
    %v1756 = vmul.f32 %v1244, %v1244
    %v1757 = vmul.f32 %v1245, %v1245
    %v1758 = vmul.f32 %v1246, %v1246
    %v1759 = vmul.f32 %v1247, %v1247
    %v1760 = vmul.f32 %v1248, %v1248
    %v1761 = vmul.f32 %v1249, %v1249
    %v1762 = vmul.f32 %v1250, %v1250
    %v1763 = vmul.f32 %v1251, %v1251
    %v1764 = vmul.f32 %v1252, %v1252
    %v1765 = vmul.f32 %v1253, %v1253
    %v1766 = vmul.f32 %v1254, %v1254
    %v1767 = vmul.f32 %v1255, %v1255
    %v1768 = vmul.f32 %v1256, %v1256
    %v1769 = vmul.f32 %v1257, %v1257
    %v1770 = vmul.f32 %v1258, %v1258
    %v1771 = vmul.f32 %v1259, %v1259
    %v1772 = vmul.f32 %v1260, %v1260
    %v1773 = vmul.f32 %v1261, %v1261
    %v1774 = vmul.f32 %v1262, %v1262
    %v1775 = vmul.f32 %v1263, %v1263
    %v1776 = vmul.f32 %v1264, %v1264
    %v1777 = vmul.f32 %v1265, %v1265
    %v1778 = vmul.f32 %v1266, %v1266
    %v1779 = vmul.f32 %v1267, %v1267
    %v1780 = vmul.f32 %v1268, %v1268
    %v1781 = vmul.f32 %v1269, %v1269
    %v1782 = vmul.f32 %v1270, %v1270
    %v1783 = vmul.f32 %v1271, %v1271
    %v1784 = vmul.f32 %v1272, %v1272
    %v1785 = vmul.f32 %v1273, %v1273
    %v1786 = vmul.f32 %v1274, %v1274
    %v1787 = vmul.f32 %v1275, %v1275
    %v1788 = vmul.f32 %v1276, %v1276
    %v1789 = vmul.f32 %v1277, %v1277
    %v1790 = vmul.f32 %v1278, %v1278
    %v1791 = vmul.f32 %v1279, %v1279
    %v1792 = vmul.f32 %v1280, %v1280
    %v1793 = vmul.f32 %v1281, %v1281
    %v1794 = vmul.f32 %v1282, %v1282
    %v1795 = vmul.f32 %v1283, %v1283
    %v1796 = vmul.f32 %v1284, %v1284
    %v1797 = vmul.f32 %v1285, %v1285
    %v1798 = vmul.f32 %v1286, %v1286
    %v1799 = vmul.f32 %v1287, %v1287
    %v1800 = vmul.f32 %v1288, %v1288
    %v1801 = vmul.f32 %v1289, %v1289
    %v1802 = vmul.f32 %v1290, %v1290
    %v1803 = vmul.f32 %v1291, %v1291
    %v1804 = vmul.f32 %v1292, %v1292
    %v1805 = vmul.f32 %v1293, %v1293
    %v1806 = vmul.f32 %v1294, %v1294
    %v1807 = vmul.f32 %v1295, %v1295
    %v1808 = vmul.f32 %v1296, %v1296
    %v1809 = vmul.f32 %v1297, %v1297
    %v1810 = vmul.f32 %v1298, %v1298
    %v1811 = vmul.f32 %v1299, %v1299
    %v1812 = vmul.f32 %v1300, %v1300
    %v1813 = vmul.f32 %v1301, %v1301
    %v1814 = vmul.f32 %v1302, %v1302
    %v1815 = vmul.f32 %v1303, %v1303
    %v1816 = vmul.f32 %v1304, %v1304
    %v1817 = vmul.f32 %v1305, %v1305
    %v1818 = vmul.f32 %v1306, %v1306
    %v1819 = vmul.f32 %v1307, %v1307
    %v1820 = vmul.f32 %v1308, %v1308
    %v1821 = vmul.f32 %v1309, %v1309
    %v1822 = vmul.f32 %v1310, %v1310
    %v1823 = vmul.f32 %v1311, %v1311
    %v1824 = vmul.f32 %v1312, %v1312
    %v1825 = vmul.f32 %v1313, %v1313
    %v1826 = vmul.f32 %v1314, %v1314
    %v1827 = vmul.f32 %v1315, %v1315
    %v1828 = vmul.f32 %v1316, %v1316
    %v1829 = vmul.f32 %v1317, %v1317
    %v1830 = vmul.f32 %v1318, %v1318
    %v1831 = vmul.f32 %v1319, %v1319
    %v1832 = vmul.f32 %v1320, %v1320
    %v1833 = vmul.f32 %v1321, %v1321
    %v1834 = vmul.f32 %v1322, %v1322
    %v1835 = vmul.f32 %v1323, %v1323
    %v1836 = vmul.f32 %v1324, %v1324
    %v1837 = vmul.f32 %v1325, %v1325
    %v1838 = vmul.f32 %v1326, %v1326
    %v1839 = vmul.f32 %v1327, %v1327
    %v1840 = vmul.f32 %v1328, %v1328
    %v1841 = vmul.f32 %v1329, %v1329
    %v1842 = vmul.f32 %v1330, %v1330
    %v1843 = vmul.f32 %v1331, %v1331
    %v1844 = vmul.f32 %v1332, %v1332
    %v1845 = vmul.f32 %v1333, %v1333
    %v1846 = vmul.f32 %v1334, %v1334
    %v1847 = vmul.f32 %v1335, %v1335
    %v1848 = vmul.f32 %v1336, %v1336
    %v1849 = vmul.f32 %v1337, %v1337
    %v1850 = vmul.f32 %v1338, %v1338
    %v1851 = vmul.f32 %v1339, %v1339
    %v1852 = vmul.f32 %v1340, %v1340
    %v1853 = vmul.f32 %v1341, %v1341
    %v1854 = vmul.f32 %v1342, %v1342
    %v1855 = vmul.f32 %v1343, %v1343
    %v1856 = vmul.f32 %v1344, %v1344
    %v1857 = vmul.f32 %v1345, %v1345
    %v1858 = vmul.f32 %v1346, %v1346
    %v1859 = vmul.f32 %v1347, %v1347
    %v1860 = vmul.f32 %v1348, %v1348
    %v1861 = vmul.f32 %v1349, %v1349
    %v1862 = vmul.f32 %v1350, %v1350
    %v1863 = vmul.f32 %v1351, %v1351
    %v1864 = vmul.f32 %v1352, %v1352
    %v1865 = vmul.f32 %v1353, %v1353
    %v1866 = vmul.f32 %v1354, %v1354
    %v1867 = vmul.f32 %v1355, %v1355
    %v1868 = vmul.f32 %v1356, %v1356
    %v1869 = vmul.f32 %v1357, %v1357
    %v1870 = vmul.f32 %v1358, %v1358
    %v1871 = vmul.f32 %v1359, %v1359
    %v1872 = vmul.f32 %v1360, %v1360
    %v1873 = vmul.f32 %v1361, %v1361
    %v1874 = vmul.f32 %v1362, %v1362
    %v1875 = vmul.f32 %v1363, %v1363
    %v1876 = vmul.f32 %v1364, %v1364
    %v1877 = vmul.f32 %v1365, %v1365
    %v1878 = vmul.f32 %v1366, %v1366
    %v1879 = vmul.f32 %v1367, %v1367
    %v1880 = vmul.f32 %v1368, %v1368
    %v1881 = vmul.f32 %v1369, %v1369
    %v1882 = vmul.f32 %v1370, %v1370
    %v1883 = vmul.f32 %v1371, %v1371
    %v1884 = vmul.f32 %v1372, %v1372
    %v1885 = vmul.f32 %v1373, %v1373
    %v1886 = vmul.f32 %v1374, %v1374
    %v1887 = vmul.f32 %v1375, %v1375
    %v1888 = vmul.f32 %v1376, %v1376
    %v1889 = vmul.f32 %v1377, %v1377
    %v1890 = vmul.f32 %v1378, %v1378
    %v1891 = vmul.f32 %v1379, %v1379
    %v1892 = vmul.f32 %v1380, %v1380
    %v1893 = vmul.f32 %v1381, %v1381
    %v1894 = vmul.f32 %v1382, %v1382
    %v1895 = vmul.f32 %v1383, %v1383
    %v1896 = vmul.f32 %v1384, %v1384
    %v1897 = vmul.f32 %v1385, %v1385
    %v1898 = vmul.f32 %v1386, %v1386
    %v1899 = vmul.f32 %v1387, %v1387
    %v1900 = vmul.f32 %v1388, %v1388
    %v1901 = vmul.f32 %v1389, %v1389
    %v1902 = vmul.f32 %v1390, %v1390
    %v1903 = vmul.f32 %v1391, %v1391
    %v1904 = vmul.f32 %v1392, %v1392
    %v1905 = vmul.f32 %v1393, %v1393
    %v1906 = vmul.f32 %v1394, %v1394
    %v1907 = vmul.f32 %v1395, %v1395
    %v1908 = vmul.f32 %v1396, %v1396
    %v1909 = vmul.f32 %v1397, %v1397
    %v1910 = vmul.f32 %v1398, %v1398
    %v1911 = vmul.f32 %v1399, %v1399
    %v1912 = vmul.f32 %v1400, %v1400
    %v1913 = vmul.f32 %v1401, %v1401
    %v1914 = vmul.f32 %v1402, %v1402
    %v1915 = vmul.f32 %v1403, %v1403
    %v1916 = vmul.f32 %v1404, %v1404
    %v1917 = vmul.f32 %v1405, %v1405
    %v1918 = vmul.f32 %v1406, %v1406
    %v1919 = vmul.f32 %v1407, %v1407
    %v1920 = vmul.f32 %v1408, %v1408
    %v1921 = vmul.f32 %v1409, %v1409
    %v1922 = vmul.f32 %v1410, %v1410
    %v1923 = vmul.f32 %v1411, %v1411
    %v1924 = vmul.f32 %v1412, %v1412
    %v1925 = vmul.f32 %v1413, %v1413
    %v1926 = vmul.f32 %v1414, %v1414
    %v1927 = vmul.f32 %v1415, %v1415
    %v1928 = vmul.f32 %v1416, %v1416
    %v1929 = vmul.f32 %v1417, %v1417
    %v1930 = vmul.f32 %v1418, %v1418
    %v1931 = vmul.f32 %v1419, %v1419
    %v1932 = vmul.f32 %v1420, %v1420
    %v1933 = vmul.f32 %v1421, %v1421
    %v1934 = vmul.f32 %v1422, %v1422
    %v1935 = vmul.f32 %v1423, %v1423
    %v1936 = vmul.f32 %v1424, %v1424
    %v1937 = vmul.f32 %v1425, %v1425
    %v1938 = vmul.f32 %v1426, %v1426
    %v1939 = vmul.f32 %v1427, %v1427
    %v1940 = vmul.f32 %v1428, %v1428
    %v1941 = vmul.f32 %v1429, %v1429
    %v1942 = vmul.f32 %v1430, %v1430
    %v1943 = vmul.f32 %v1431, %v1431
    %v1944 = vmul.f32 %v1432, %v1432
    %v1945 = vmul.f32 %v1433, %v1433
    %v1946 = vmul.f32 %v1434, %v1434
    %v1947 = vmul.f32 %v1435, %v1435
    %v1948 = vmul.f32 %v1436, %v1436
    %v1949 = vmul.f32 %v1437, %v1437
    %v1950 = vmul.f32 %v1438, %v1438
    %v1951 = vmul.f32 %v1439, %v1439
    %v1952 = vmul.f32 %v1440, %v1440
    %v1953 = vmul.f32 %v1441, %v1441
    %v1954 = vmul.f32 %v1442, %v1442
    %v1955 = vmul.f32 %v1443, %v1443
    %v1956 = vmul.f32 %v1444, %v1444
    %v1957 = vmul.f32 %v1445, %v1445
    %v1958 = vmul.f32 %v1446, %v1446
    %v1959 = vmul.f32 %v1447, %v1447
    %v1960 = vmul.f32 %v1448, %v1448
    %v1961 = vmul.f32 %v1449, %v1449
    %v1962 = vmul.f32 %v1450, %v1450
    %v1963 = vmul.f32 %v1451, %v1451
    %v1964 = vmul.f32 %v1452, %v1452
    %v1965 = vmul.f32 %v1453, %v1453
    %v1966 = vmul.f32 %v1454, %v1454
    %v1967 = vmul.f32 %v1455, %v1455
    %v1968 = vmul.f32 %v1456, %v1456
    %v1969 = vmul.f32 %v1457, %v1457
    %v1970 = vmul.f32 %v1458, %v1458
    %v1971 = vmul.f32 %v1459, %v1459
    %v1972 = vmul.f32 %v1460, %v1460
    %v1973 = vmul.f32 %v1461, %v1461
    %v1974 = vmul.f32 %v1462, %v1462
    %v1975 = vmul.f32 %v1463, %v1463
    %v1976 = vmul.f32 %v1464, %v1464
    %v1977 = vmul.f32 %v1465, %v1465
    %v1978 = vmul.f32 %v1466, %v1466
    %v1979 = vmul.f32 %v1467, %v1467
    %v1980 = vmul.f32 %v1468, %v1468
    %v1981 = vmul.f32 %v1469, %v1469
    %v1982 = vmul.f32 %v1470, %v1470
    %v1983 = vmul.f32 %v1471, %v1471
    %v1984 = vmul.f32 %v1472, %v1472
    %v1985 = vmul.f32 %v1473, %v1473
    %v1986 = vmul.f32 %v1474, %v1474
    %v1987 = vmul.f32 %v1475, %v1475
    %v1988 = vmul.f32 %v1476, %v1476
    %v1989 = vmul.f32 %v1477, %v1477
    %v1990 = vmul.f32 %v1478, %v1478
    %v1991 = vmul.f32 %v1479, %v1479
    %v1992 = vmul.f32 %v1480, %v1480
    %v1993 = vmul.f32 %v1481, %v1481
    %v1994 = vmul.f32 %v1482, %v1482
    %v1995 = vmul.f32 %v1483, %v1483
    %v1996 = vmul.f32 %v1484, %v1484
    %v1997 = vmul.f32 %v1485, %v1485
    %v1998 = vmul.f32 %v1486, %v1486
    %v1999 = vmul.f32 %v1487, %v1487
    %v2000 = vmul.f32 %v1488, %v1488
    %v2001 = vmul.f32 %v1489, %v1489
    %v2002 = vmul.f32 %v1490, %v1490
    %v2003 = vmul.f32 %v1491, %v1491
    %v2004 = vmul.f32 %v1492, %v1492
    %v2005 = vmul.f32 %v1493, %v1493
    %v2006 = vmul.f32 %v1494, %v1494
    %v2007 = vmul.f32 %v1495, %v1495
    %v2008 = vmul.f32 %v1496, %v1496
    %v2009 = vmul.f32 %v1497, %v1497
    %v2010 = vmul.f32 %v1498, %v1498
    %v2011 = vmul.f32 %v1499, %v1499
    %v2012 = vmul.f32 %v1500, %v1500
    %v2013 = vmul.f32 %v1501, %v1501
    %v2014 = vmul.f32 %v1502, %v1502
    %v2015 = vmul.f32 %v1503, %v1503
    %v2016 = vmul.f32 %v1504, %v1504
    %v2017 = vmul.f32 %v1505, %v1505
    %v2018 = vmul.f32 %v1506, %v1506
    %v2019 = vmul.f32 %v1507, %v1507
    %v2020 = vmul.f32 %v1508, %v1508
    %v2021 = vmul.f32 %v1509, %v1509
    %v2022 = vmul.f32 %v1510, %v1510
    %v2023 = vmul.f32 %v1511, %v1511
    %v2024 = vmul.f32 %v1512, %v1512
    %v2025 = vmul.f32 %v1513, %v1513
    %v2026 = vmul.f32 %v1514, %v1514
    %v2027 = vmul.f32 %v1515, %v1515
    %v2028 = vmul.f32 %v1516, %v1516
    %v2029 = vmul.f32 %v1517, %v1517
    %v2030 = vmul.f32 %v1518, %v1518
    %v2031 = vmul.f32 %v1519, %v1519
    %v2032 = vmul.f32 %v1520, %v1520
    %v2033 = vmul.f32 %v1521, %v1521
    %v2034 = vmul.f32 %v1522, %v1522
    %v2035 = vmul.f32 %v1523, %v1523
    %v2036 = vmul.f32 %v1524, %v1524
    %v2037 = vmul.f32 %v1525, %v1525
    %v2038 = vmul.f32 %v1526, %v1526
    %v2039 = vmul.f32 %v1527, %v1527
    %v2040 = vmul.f32 %v1528, %v1528
    %v2041 = vmul.f32 %v1529, %v1529
    %v2042 = vmul.f32 %v1530, %v1530
    %v2043 = vmul.f32 %v1531, %v1531
    %v2044 = vmul.f32 %v1532, %v1532
    %v2045 = vmul.f32 %v1533, %v1533
    %v2046 = vmul.f32 %v1534, %v1534
    %v2047 = vmul.f32 %v1535, %v1535
    %v2048 = vmul.f32 %v1536, %v1536
    %v2049 = vmul.f32 %v1537, %v1537
    %v2050 = vmul.f32 %v1538, %v1538
    %v2051 = vmul.f32 %v1539, %v1539
    %v2052 = vmul.f32 %v1540, %v1540
    %v2053 = vmul.f32 %v1541, %v1541
    %v2054 = vmul.f32 %v1542, %v1542
    %v2055 = vmul.f32 %v1543, %v1543
    %v2056 = vmul.f32 %v1544, %v1544
    %v2057 = vmul.f32 %v1545, %v1545
    %v2058 = vmul.f32 %v1546, %v1546
    %v2059 = vmul.f32 %v1547, %v1547
    %v2060 = vmul.f32 %v1548, %v1548
    %v2061 = vmul.f32 %v1549, %v1549
    %v2062 = vmul.f32 %v1550, %v1550
    %v2063 = vmul.f32 %v1551, %v1551
    %v2064 = vmul.f32 %v1552, %v1552
    %v2065 = vmul.f32 %v1553, %v1553
    %v2066 = vmul.f32 %v1554, %v1554
    %v2067 = vmul.f32 %v1555, %v1555
    %v2068 = vmul.f32 %v1556, %v1556
    %v2069 = vmul.f32 %v1557, %v1557
    %v2070 = vmul.f32 %v1558, %v1558
    %v2071 = vmul.f32 %v1559, %v1559
    %v2072 = vmul.f32 %v1560, %v1560
    %v2073 = vmul.f32 %v1561, %v1561
    %v2074 = vmul.f32 %v1562, %v1562
    %v2075 = vmul.f32 %v1563, %v1563
    %v2076 = vmul.f32 %v1564, %v1564
    %v2077 = vmul.f32 %v1565, %v1565
    %v2078 = vmul.f32 %v1566, %v1566
    %v2079 = vmul.f32 %v1567, %v1567
    %v2080 = vmul.f32 %v1568, %v1568
    %v2081 = vmul.f32 %v1569, %v1569
    %v2082 = vmul.f32 %v1570, %v1570
    %v2083 = vmul.f32 %v1571, %v1571
    %v2084 = vmul.f32 %v1572, %v1572
    %v2085 = vmul.f32 %v1573, %v1573
    %v2086 = vmul.f32 %v1574, %v1574
    %v2087 = vmul.f32 %v1575, %v1575
    %v2088 = vadd.f32 %v1576, %v1577
    %v2089 = vadd.f32 %v2088, %v1578
    %v2090 = vadd.f32 %v2089, %v1579
    %v2091 = vadd.f32 %v2090, %v1580
    %v2092 = vadd.f32 %v2091, %v1581
    %v2093 = vadd.f32 %v2092, %v1582
    %v2094 = vadd.f32 %v2093, %v1583
    %v2095 = vadd.f32 %v2094, %v1584
    %v2096 = vadd.f32 %v2095, %v1585
    %v2097 = vadd.f32 %v2096, %v1586
    %v2098 = vadd.f32 %v2097, %v1587
    %v2099 = vadd.f32 %v2098, %v1588
    %v2100 = vadd.f32 %v2099, %v1589
    %v2101 = vadd.f32 %v2100, %v1590
    %v2102 = vadd.f32 %v2101, %v1591
    %v2103 = vadd.f32 %v2102, %v1592
    %v2104 = vadd.f32 %v2103, %v1593
    %v2105 = vadd.f32 %v2104, %v1594
    %v2106 = vadd.f32 %v2105, %v1595
    %v2107 = vadd.f32 %v2106, %v1596
    %v2108 = vadd.f32 %v2107, %v1597
    %v2109 = vadd.f32 %v2108, %v1598
    %v2110 = vadd.f32 %v2109, %v1599
    %v2111 = vadd.f32 %v2110, %v1600
    %v2112 = vadd.f32 %v2111, %v1601
    %v2113 = vadd.f32 %v2112, %v1602
    %v2114 = vadd.f32 %v2113, %v1603
    %v2115 = vadd.f32 %v2114, %v1604
    %v2116 = vadd.f32 %v2115, %v1605
    %v2117 = vadd.f32 %v2116, %v1606
    %v2118 = vadd.f32 %v2117, %v1607
    %v2119 = vadd.f32 %v2118, %v1608
    %v2120 = vadd.f32 %v2119, %v1609
    %v2121 = vadd.f32 %v2120, %v1610
    %v2122 = vadd.f32 %v2121, %v1611
    %v2123 = vadd.f32 %v2122, %v1612
    %v2124 = vadd.f32 %v2123, %v1613
    %v2125 = vadd.f32 %v2124, %v1614
    %v2126 = vadd.f32 %v2125, %v1615
    %v2127 = vadd.f32 %v2126, %v1616
    %v2128 = vadd.f32 %v2127, %v1617
    %v2129 = vadd.f32 %v2128, %v1618
    %v2130 = vadd.f32 %v2129, %v1619
    %v2131 = vadd.f32 %v2130, %v1620
    %v2132 = vadd.f32 %v2131, %v1621
    %v2133 = vadd.f32 %v2132, %v1622
    %v2134 = vadd.f32 %v2133, %v1623
    %v2135 = vadd.f32 %v2134, %v1624
    %v2136 = vadd.f32 %v2135, %v1625
    %v2137 = vadd.f32 %v2136, %v1626
    %v2138 = vadd.f32 %v2137, %v1627
    %v2139 = vadd.f32 %v2138, %v1628
    %v2140 = vadd.f32 %v2139, %v1629
    %v2141 = vadd.f32 %v2140, %v1630
    %v2142 = vadd.f32 %v2141, %v1631
    %v2143 = vadd.f32 %v2142, %v1632
    %v2144 = vadd.f32 %v2143, %v1633
    %v2145 = vadd.f32 %v2144, %v1634
    %v2146 = vadd.f32 %v2145, %v1635
    %v2147 = vadd.f32 %v2146, %v1636
    %v2148 = vadd.f32 %v2147, %v1637
    %v2149 = vadd.f32 %v2148, %v1638
    %v2150 = vadd.f32 %v2149, %v1639
    %v2151 = vadd.f32 %v2150, %v1640
    %v2152 = vadd.f32 %v2151, %v1641
    %v2153 = vadd.f32 %v2152, %v1642
    %v2154 = vadd.f32 %v2153, %v1643
    %v2155 = vadd.f32 %v2154, %v1644
    %v2156 = vadd.f32 %v2155, %v1645
    %v2157 = vadd.f32 %v2156, %v1646
    %v2158 = vadd.f32 %v2157, %v1647
    %v2159 = vadd.f32 %v2158, %v1648
    %v2160 = vadd.f32 %v2159, %v1649
    %v2161 = vadd.f32 %v2160, %v1650
    %v2162 = vadd.f32 %v2161, %v1651
    %v2163 = vadd.f32 %v2162, %v1652
    %v2164 = vadd.f32 %v2163, %v1653
    %v2165 = vadd.f32 %v2164, %v1654
    %v2166 = vadd.f32 %v2165, %v1655
    %v2167 = vadd.f32 %v2166, %v1656
    %v2168 = vadd.f32 %v2167, %v1657
    %v2169 = vadd.f32 %v2168, %v1658
    %v2170 = vadd.f32 %v2169, %v1659
    %v2171 = vadd.f32 %v2170, %v1660
    %v2172 = vadd.f32 %v2171, %v1661
    %v2173 = vadd.f32 %v2172, %v1662
    %v2174 = vadd.f32 %v2173, %v1663
    %v2175 = vadd.f32 %v2174, %v1664
    %v2176 = vadd.f32 %v2175, %v1665
    %v2177 = vadd.f32 %v2176, %v1666
    %v2178 = vadd.f32 %v2177, %v1667
    %v2179 = vadd.f32 %v2178, %v1668
    %v2180 = vadd.f32 %v2179, %v1669
    %v2181 = vadd.f32 %v2180, %v1670
    %v2182 = vadd.f32 %v2181, %v1671
    %v2183 = vadd.f32 %v2182, %v1672
    %v2184 = vadd.f32 %v2183, %v1673
    %v2185 = vadd.f32 %v2184, %v1674
    %v2186 = vadd.f32 %v2185, %v1675
    %v2187 = vadd.f32 %v2186, %v1676
    %v2188 = vadd.f32 %v2187, %v1677
    %v2189 = vadd.f32 %v2188, %v1678
    %v2190 = vadd.f32 %v2189, %v1679
    %v2191 = vadd.f32 %v2190, %v1680
    %v2192 = vadd.f32 %v2191, %v1681
    %v2193 = vadd.f32 %v2192, %v1682
    %v2194 = vadd.f32 %v2193, %v1683
    %v2195 = vadd.f32 %v2194, %v1684
    %v2196 = vadd.f32 %v2195, %v1685
    %v2197 = vadd.f32 %v2196, %v1686
    %v2198 = vadd.f32 %v2197, %v1687
    %v2199 = vadd.f32 %v2198, %v1688
    %v2200 = vadd.f32 %v2199, %v1689
    %v2201 = vadd.f32 %v2200, %v1690
    %v2202 = vadd.f32 %v2201, %v1691
    %v2203 = vadd.f32 %v2202, %v1692
    %v2204 = vadd.f32 %v2203, %v1693
    %v2205 = vadd.f32 %v2204, %v1694
    %v2206 = vadd.f32 %v2205, %v1695
    %v2207 = vadd.f32 %v2206, %v1696
    %v2208 = vadd.f32 %v2207, %v1697
    %v2209 = vadd.f32 %v2208, %v1698
    %v2210 = vadd.f32 %v2209, %v1699
    %v2211 = vadd.f32 %v2210, %v1700
    %v2212 = vadd.f32 %v2211, %v1701
    %v2213 = vadd.f32 %v2212, %v1702
    %v2214 = vadd.f32 %v2213, %v1703
    %v2215 = vadd.f32 %v2214, %v1704
    %v2216 = vadd.f32 %v2215, %v1705
    %v2217 = vadd.f32 %v2216, %v1706
    %v2218 = vadd.f32 %v2217, %v1707
    %v2219 = vadd.f32 %v2218, %v1708
    %v2220 = vadd.f32 %v2219, %v1709
    %v2221 = vadd.f32 %v2220, %v1710
    %v2222 = vadd.f32 %v2221, %v1711
    %v2223 = vadd.f32 %v2222, %v1712
    %v2224 = vadd.f32 %v2223, %v1713
    %v2225 = vadd.f32 %v2224, %v1714
    %v2226 = vadd.f32 %v2225, %v1715
    %v2227 = vadd.f32 %v2226, %v1716
    %v2228 = vadd.f32 %v2227, %v1717
    %v2229 = vadd.f32 %v2228, %v1718
    %v2230 = vadd.f32 %v2229, %v1719
    %v2231 = vadd.f32 %v2230, %v1720
    %v2232 = vadd.f32 %v2231, %v1721
    %v2233 = vadd.f32 %v2232, %v1722
    %v2234 = vadd.f32 %v2233, %v1723
    %v2235 = vadd.f32 %v2234, %v1724
    %v2236 = vadd.f32 %v2235, %v1725
    %v2237 = vadd.f32 %v2236, %v1726
    %v2238 = vadd.f32 %v2237, %v1727
    %v2239 = vadd.f32 %v2238, %v1728
    %v2240 = vadd.f32 %v2239, %v1729
    %v2241 = vadd.f32 %v2240, %v1730
    %v2242 = vadd.f32 %v2241, %v1731
    %v2243 = vadd.f32 %v2242, %v1732
    %v2244 = vadd.f32 %v2243, %v1733
    %v2245 = vadd.f32 %v2244, %v1734
    %v2246 = vadd.f32 %v2245, %v1735
    %v2247 = vadd.f32 %v2246, %v1736
    %v2248 = vadd.f32 %v2247, %v1737
    %v2249 = vadd.f32 %v2248, %v1738
    %v2250 = vadd.f32 %v2249, %v1739
    %v2251 = vadd.f32 %v2250, %v1740
    %v2252 = vadd.f32 %v2251, %v1741
    %v2253 = vadd.f32 %v2252, %v1742
    %v2254 = vadd.f32 %v2253, %v1743
    %v2255 = vadd.f32 %v2254, %v1744
    %v2256 = vadd.f32 %v2255, %v1745
    %v2257 = vadd.f32 %v2256, %v1746
    %v2258 = vadd.f32 %v2257, %v1747
    %v2259 = vadd.f32 %v2258, %v1748
    %v2260 = vadd.f32 %v2259, %v1749
    %v2261 = vadd.f32 %v2260, %v1750
    %v2262 = vadd.f32 %v2261, %v1751
    %v2263 = vadd.f32 %v2262, %v1752
    %v2264 = vadd.f32 %v2263, %v1753
    %v2265 = vadd.f32 %v2264, %v1754
    %v2266 = vadd.f32 %v2265, %v1755
    %v2267 = vadd.f32 %v2266, %v1756
    %v2268 = vadd.f32 %v2267, %v1757
    %v2269 = vadd.f32 %v2268, %v1758
    %v2270 = vadd.f32 %v2269, %v1759
    %v2271 = vadd.f32 %v2270, %v1760
    %v2272 = vadd.f32 %v2271, %v1761
    %v2273 = vadd.f32 %v2272, %v1762
    %v2274 = vadd.f32 %v2273, %v1763
    %v2275 = vadd.f32 %v2274, %v1764
    %v2276 = vadd.f32 %v2275, %v1765
    %v2277 = vadd.f32 %v2276, %v1766
    %v2278 = vadd.f32 %v2277, %v1767
    %v2279 = vadd.f32 %v2278, %v1768
    %v2280 = vadd.f32 %v2279, %v1769
    %v2281 = vadd.f32 %v2280, %v1770
    %v2282 = vadd.f32 %v2281, %v1771
    %v2283 = vadd.f32 %v2282, %v1772
    %v2284 = vadd.f32 %v2283, %v1773
    %v2285 = vadd.f32 %v2284, %v1774
    %v2286 = vadd.f32 %v2285, %v1775
    %v2287 = vadd.f32 %v2286, %v1776
    %v2288 = vadd.f32 %v2287, %v1777
    %v2289 = vadd.f32 %v2288, %v1778
    %v2290 = vadd.f32 %v2289, %v1779
    %v2291 = vadd.f32 %v2290, %v1780
    %v2292 = vadd.f32 %v2291, %v1781
    %v2293 = vadd.f32 %v2292, %v1782
    %v2294 = vadd.f32 %v2293, %v1783
    %v2295 = vadd.f32 %v2294, %v1784
    %v2296 = vadd.f32 %v2295, %v1785
    %v2297 = vadd.f32 %v2296, %v1786
    %v2298 = vadd.f32 %v2297, %v1787
    %v2299 = vadd.f32 %v2298, %v1788
    %v2300 = vadd.f32 %v2299, %v1789
    %v2301 = vadd.f32 %v2300, %v1790
    %v2302 = vadd.f32 %v2301, %v1791
    %v2303 = vadd.f32 %v2302, %v1792
    %v2304 = vadd.f32 %v2303, %v1793
    %v2305 = vadd.f32 %v2304, %v1794
    %v2306 = vadd.f32 %v2305, %v1795
    %v2307 = vadd.f32 %v2306, %v1796
    %v2308 = vadd.f32 %v2307, %v1797
    %v2309 = vadd.f32 %v2308, %v1798
    %v2310 = vadd.f32 %v2309, %v1799
    %v2311 = vadd.f32 %v2310, %v1800
    %v2312 = vadd.f32 %v2311, %v1801
    %v2313 = vadd.f32 %v2312, %v1802
    %v2314 = vadd.f32 %v2313, %v1803
    %v2315 = vadd.f32 %v2314, %v1804
    %v2316 = vadd.f32 %v2315, %v1805
    %v2317 = vadd.f32 %v2316, %v1806
    %v2318 = vadd.f32 %v2317, %v1807
    %v2319 = vadd.f32 %v2318, %v1808
    %v2320 = vadd.f32 %v2319, %v1809
    %v2321 = vadd.f32 %v2320, %v1810
    %v2322 = vadd.f32 %v2321, %v1811
    %v2323 = vadd.f32 %v2322, %v1812
    %v2324 = vadd.f32 %v2323, %v1813
    %v2325 = vadd.f32 %v2324, %v1814
    %v2326 = vadd.f32 %v2325, %v1815
    %v2327 = vadd.f32 %v2326, %v1816
    %v2328 = vadd.f32 %v2327, %v1817
    %v2329 = vadd.f32 %v2328, %v1818
    %v2330 = vadd.f32 %v2329, %v1819
    %v2331 = vadd.f32 %v2330, %v1820
    %v2332 = vadd.f32 %v2331, %v1821
    %v2333 = vadd.f32 %v2332, %v1822
    %v2334 = vadd.f32 %v2333, %v1823
    %v2335 = vadd.f32 %v2334, %v1824
    %v2336 = vadd.f32 %v2335, %v1825
    %v2337 = vadd.f32 %v2336, %v1826
    %v2338 = vadd.f32 %v2337, %v1827
    %v2339 = vadd.f32 %v2338, %v1828
    %v2340 = vadd.f32 %v2339, %v1829
    %v2341 = vadd.f32 %v2340, %v1830
    %v2342 = vadd.f32 %v2341, %v1831
    %v2343 = vadd.f32 %v2342, %v1832
    %v2344 = vadd.f32 %v2343, %v1833
    %v2345 = vadd.f32 %v2344, %v1834
    %v2346 = vadd.f32 %v2345, %v1835
    %v2347 = vadd.f32 %v2346, %v1836
    %v2348 = vadd.f32 %v2347, %v1837
    %v2349 = vadd.f32 %v2348, %v1838
    %v2350 = vadd.f32 %v2349, %v1839
    %v2351 = vadd.f32 %v2350, %v1840
    %v2352 = vadd.f32 %v2351, %v1841
    %v2353 = vadd.f32 %v2352, %v1842
    %v2354 = vadd.f32 %v2353, %v1843
    %v2355 = vadd.f32 %v2354, %v1844
    %v2356 = vadd.f32 %v2355, %v1845
    %v2357 = vadd.f32 %v2356, %v1846
    %v2358 = vadd.f32 %v2357, %v1847
    %v2359 = vadd.f32 %v2358, %v1848
    %v2360 = vadd.f32 %v2359, %v1849
    %v2361 = vadd.f32 %v2360, %v1850
    %v2362 = vadd.f32 %v2361, %v1851
    %v2363 = vadd.f32 %v2362, %v1852
    %v2364 = vadd.f32 %v2363, %v1853
    %v2365 = vadd.f32 %v2364, %v1854
    %v2366 = vadd.f32 %v2365, %v1855
    %v2367 = vadd.f32 %v2366, %v1856
    %v2368 = vadd.f32 %v2367, %v1857
    %v2369 = vadd.f32 %v2368, %v1858
    %v2370 = vadd.f32 %v2369, %v1859
    %v2371 = vadd.f32 %v2370, %v1860
    %v2372 = vadd.f32 %v2371, %v1861
    %v2373 = vadd.f32 %v2372, %v1862
    %v2374 = vadd.f32 %v2373, %v1863
    %v2375 = vadd.f32 %v2374, %v1864
    %v2376 = vadd.f32 %v2375, %v1865
    %v2377 = vadd.f32 %v2376, %v1866
    %v2378 = vadd.f32 %v2377, %v1867
    %v2379 = vadd.f32 %v2378, %v1868
    %v2380 = vadd.f32 %v2379, %v1869
    %v2381 = vadd.f32 %v2380, %v1870
    %v2382 = vadd.f32 %v2381, %v1871
    %v2383 = vadd.f32 %v2382, %v1872
    %v2384 = vadd.f32 %v2383, %v1873
    %v2385 = vadd.f32 %v2384, %v1874
    %v2386 = vadd.f32 %v2385, %v1875
    %v2387 = vadd.f32 %v2386, %v1876
    %v2388 = vadd.f32 %v2387, %v1877
    %v2389 = vadd.f32 %v2388, %v1878
    %v2390 = vadd.f32 %v2389, %v1879
    %v2391 = vadd.f32 %v2390, %v1880
    %v2392 = vadd.f32 %v2391, %v1881
    %v2393 = vadd.f32 %v2392, %v1882
    %v2394 = vadd.f32 %v2393, %v1883
    %v2395 = vadd.f32 %v2394, %v1884
    %v2396 = vadd.f32 %v2395, %v1885
    %v2397 = vadd.f32 %v2396, %v1886
    %v2398 = vadd.f32 %v2397, %v1887
    %v2399 = vadd.f32 %v2398, %v1888
    %v2400 = vadd.f32 %v2399, %v1889
    %v2401 = vadd.f32 %v2400, %v1890
    %v2402 = vadd.f32 %v2401, %v1891
    %v2403 = vadd.f32 %v2402, %v1892
    %v2404 = vadd.f32 %v2403, %v1893
    %v2405 = vadd.f32 %v2404, %v1894
    %v2406 = vadd.f32 %v2405, %v1895
    %v2407 = vadd.f32 %v2406, %v1896
    %v2408 = vadd.f32 %v2407, %v1897
    %v2409 = vadd.f32 %v2408, %v1898
    %v2410 = vadd.f32 %v2409, %v1899
    %v2411 = vadd.f32 %v2410, %v1900
    %v2412 = vadd.f32 %v2411, %v1901
    %v2413 = vadd.f32 %v2412, %v1902
    %v2414 = vadd.f32 %v2413, %v1903
    %v2415 = vadd.f32 %v2414, %v1904
    %v2416 = vadd.f32 %v2415, %v1905
    %v2417 = vadd.f32 %v2416, %v1906
    %v2418 = vadd.f32 %v2417, %v1907
    %v2419 = vadd.f32 %v2418, %v1908
    %v2420 = vadd.f32 %v2419, %v1909
    %v2421 = vadd.f32 %v2420, %v1910
    %v2422 = vadd.f32 %v2421, %v1911
    %v2423 = vadd.f32 %v2422, %v1912
    %v2424 = vadd.f32 %v2423, %v1913
    %v2425 = vadd.f32 %v2424, %v1914
    %v2426 = vadd.f32 %v2425, %v1915
    %v2427 = vadd.f32 %v2426, %v1916
    %v2428 = vadd.f32 %v2427, %v1917
    %v2429 = vadd.f32 %v2428, %v1918
    %v2430 = vadd.f32 %v2429, %v1919
    %v2431 = vadd.f32 %v2430, %v1920
    %v2432 = vadd.f32 %v2431, %v1921
    %v2433 = vadd.f32 %v2432, %v1922
    %v2434 = vadd.f32 %v2433, %v1923
    %v2435 = vadd.f32 %v2434, %v1924
    %v2436 = vadd.f32 %v2435, %v1925
    %v2437 = vadd.f32 %v2436, %v1926
    %v2438 = vadd.f32 %v2437, %v1927
    %v2439 = vadd.f32 %v2438, %v1928
    %v2440 = vadd.f32 %v2439, %v1929
    %v2441 = vadd.f32 %v2440, %v1930
    %v2442 = vadd.f32 %v2441, %v1931
    %v2443 = vadd.f32 %v2442, %v1932
    %v2444 = vadd.f32 %v2443, %v1933
    %v2445 = vadd.f32 %v2444, %v1934
    %v2446 = vadd.f32 %v2445, %v1935
    %v2447 = vadd.f32 %v2446, %v1936
    %v2448 = vadd.f32 %v2447, %v1937
    %v2449 = vadd.f32 %v2448, %v1938
    %v2450 = vadd.f32 %v2449, %v1939
    %v2451 = vadd.f32 %v2450, %v1940
    %v2452 = vadd.f32 %v2451, %v1941
    %v2453 = vadd.f32 %v2452, %v1942
    %v2454 = vadd.f32 %v2453, %v1943
    %v2455 = vadd.f32 %v2454, %v1944
    %v2456 = vadd.f32 %v2455, %v1945
    %v2457 = vadd.f32 %v2456, %v1946
    %v2458 = vadd.f32 %v2457, %v1947
    %v2459 = vadd.f32 %v2458, %v1948
    %v2460 = vadd.f32 %v2459, %v1949
    %v2461 = vadd.f32 %v2460, %v1950
    %v2462 = vadd.f32 %v2461, %v1951
    %v2463 = vadd.f32 %v2462, %v1952
    %v2464 = vadd.f32 %v2463, %v1953
    %v2465 = vadd.f32 %v2464, %v1954
    %v2466 = vadd.f32 %v2465, %v1955
    %v2467 = vadd.f32 %v2466, %v1956
    %v2468 = vadd.f32 %v2467, %v1957
    %v2469 = vadd.f32 %v2468, %v1958
    %v2470 = vadd.f32 %v2469, %v1959
    %v2471 = vadd.f32 %v2470, %v1960
    %v2472 = vadd.f32 %v2471, %v1961
    %v2473 = vadd.f32 %v2472, %v1962
    %v2474 = vadd.f32 %v2473, %v1963
    %v2475 = vadd.f32 %v2474, %v1964
    %v2476 = vadd.f32 %v2475, %v1965
    %v2477 = vadd.f32 %v2476, %v1966
    %v2478 = vadd.f32 %v2477, %v1967
    %v2479 = vadd.f32 %v2478, %v1968
    %v2480 = vadd.f32 %v2479, %v1969
    %v2481 = vadd.f32 %v2480, %v1970
    %v2482 = vadd.f32 %v2481, %v1971
    %v2483 = vadd.f32 %v2482, %v1972
    %v2484 = vadd.f32 %v2483, %v1973
    %v2485 = vadd.f32 %v2484, %v1974
    %v2486 = vadd.f32 %v2485, %v1975
    %v2487 = vadd.f32 %v2486, %v1976
    %v2488 = vadd.f32 %v2487, %v1977
    %v2489 = vadd.f32 %v2488, %v1978
    %v2490 = vadd.f32 %v2489, %v1979
    %v2491 = vadd.f32 %v2490, %v1980
    %v2492 = vadd.f32 %v2491, %v1981
    %v2493 = vadd.f32 %v2492, %v1982
    %v2494 = vadd.f32 %v2493, %v1983
    %v2495 = vadd.f32 %v2494, %v1984
    %v2496 = vadd.f32 %v2495, %v1985
    %v2497 = vadd.f32 %v2496, %v1986
    %v2498 = vadd.f32 %v2497, %v1987
    %v2499 = vadd.f32 %v2498, %v1988
    %v2500 = vadd.f32 %v2499, %v1989
    %v2501 = vadd.f32 %v2500, %v1990
    %v2502 = vadd.f32 %v2501, %v1991
    %v2503 = vadd.f32 %v2502, %v1992
    %v2504 = vadd.f32 %v2503, %v1993
    %v2505 = vadd.f32 %v2504, %v1994
    %v2506 = vadd.f32 %v2505, %v1995
    %v2507 = vadd.f32 %v2506, %v1996
    %v2508 = vadd.f32 %v2507, %v1997
    %v2509 = vadd.f32 %v2508, %v1998
    %v2510 = vadd.f32 %v2509, %v1999
    %v2511 = vadd.f32 %v2510, %v2000
    %v2512 = vadd.f32 %v2511, %v2001
    %v2513 = vadd.f32 %v2512, %v2002
    %v2514 = vadd.f32 %v2513, %v2003
    %v2515 = vadd.f32 %v2514, %v2004
    %v2516 = vadd.f32 %v2515, %v2005
    %v2517 = vadd.f32 %v2516, %v2006
    %v2518 = vadd.f32 %v2517, %v2007
    %v2519 = vadd.f32 %v2518, %v2008
    %v2520 = vadd.f32 %v2519, %v2009
    %v2521 = vadd.f32 %v2520, %v2010
    %v2522 = vadd.f32 %v2521, %v2011
    %v2523 = vadd.f32 %v2522, %v2012
    %v2524 = vadd.f32 %v2523, %v2013
    %v2525 = vadd.f32 %v2524, %v2014
    %v2526 = vadd.f32 %v2525, %v2015
    %v2527 = vadd.f32 %v2526, %v2016
    %v2528 = vadd.f32 %v2527, %v2017
    %v2529 = vadd.f32 %v2528, %v2018
    %v2530 = vadd.f32 %v2529, %v2019
    %v2531 = vadd.f32 %v2530, %v2020
    %v2532 = vadd.f32 %v2531, %v2021
    %v2533 = vadd.f32 %v2532, %v2022
    %v2534 = vadd.f32 %v2533, %v2023
    %v2535 = vadd.f32 %v2534, %v2024
    %v2536 = vadd.f32 %v2535, %v2025
    %v2537 = vadd.f32 %v2536, %v2026
    %v2538 = vadd.f32 %v2537, %v2027
    %v2539 = vadd.f32 %v2538, %v2028
    %v2540 = vadd.f32 %v2539, %v2029
    %v2541 = vadd.f32 %v2540, %v2030
    %v2542 = vadd.f32 %v2541, %v2031
    %v2543 = vadd.f32 %v2542, %v2032
    %v2544 = vadd.f32 %v2543, %v2033
    %v2545 = vadd.f32 %v2544, %v2034
    %v2546 = vadd.f32 %v2545, %v2035
    %v2547 = vadd.f32 %v2546, %v2036
    %v2548 = vadd.f32 %v2547, %v2037
    %v2549 = vadd.f32 %v2548, %v2038
    %v2550 = vadd.f32 %v2549, %v2039
    %v2551 = vadd.f32 %v2550, %v2040
    %v2552 = vadd.f32 %v2551, %v2041
    %v2553 = vadd.f32 %v2552, %v2042
    %v2554 = vadd.f32 %v2553, %v2043
    %v2555 = vadd.f32 %v2554, %v2044
    %v2556 = vadd.f32 %v2555, %v2045
    %v2557 = vadd.f32 %v2556, %v2046
    %v2558 = vadd.f32 %v2557, %v2047
    %v2559 = vadd.f32 %v2558, %v2048
    %v2560 = vadd.f32 %v2559, %v2049
    %v2561 = vadd.f32 %v2560, %v2050
    %v2562 = vadd.f32 %v2561, %v2051
    %v2563 = vadd.f32 %v2562, %v2052
    %v2564 = vadd.f32 %v2563, %v2053
    %v2565 = vadd.f32 %v2564, %v2054
    %v2566 = vadd.f32 %v2565, %v2055
    %v2567 = vadd.f32 %v2566, %v2056
    %v2568 = vadd.f32 %v2567, %v2057
    %v2569 = vadd.f32 %v2568, %v2058
    %v2570 = vadd.f32 %v2569, %v2059
    %v2571 = vadd.f32 %v2570, %v2060
    %v2572 = vadd.f32 %v2571, %v2061
    %v2573 = vadd.f32 %v2572, %v2062
    %v2574 = vadd.f32 %v2573, %v2063
    %v2575 = vadd.f32 %v2574, %v2064
    %v2576 = vadd.f32 %v2575, %v2065
    %v2577 = vadd.f32 %v2576, %v2066
    %v2578 = vadd.f32 %v2577, %v2067
    %v2579 = vadd.f32 %v2578, %v2068
    %v2580 = vadd.f32 %v2579, %v2069
    %v2581 = vadd.f32 %v2580, %v2070
    %v2582 = vadd.f32 %v2581, %v2071
    %v2583 = vadd.f32 %v2582, %v2072
    %v2584 = vadd.f32 %v2583, %v2073
    %v2585 = vadd.f32 %v2584, %v2074
    %v2586 = vadd.f32 %v2585, %v2075
    %v2587 = vadd.f32 %v2586, %v2076
    %v2588 = vadd.f32 %v2587, %v2077
    %v2589 = vadd.f32 %v2588, %v2078
    %v2590 = vadd.f32 %v2589, %v2079
    %v2591 = vadd.f32 %v2590, %v2080
    %v2592 = vadd.f32 %v2591, %v2081
    %v2593 = vadd.f32 %v2592, %v2082
    %v2594 = vadd.f32 %v2593, %v2083
    %v2595 = vadd.f32 %v2594, %v2084
    %v2596 = vadd.f32 %v2595, %v2085
    %v2597 = vadd.f32 %v2596, %v2086
    %v2598 = vadd.f32 %v2597, %v2087
    %2599 = vadd.xlane.f32.xlu0 %v2598
    %v2600 = vpop.xlane.xlu0 %2599
    %v2601 = vrot.slane %v2600, 4
    %v2602 = vadd.f32 %v2600, %v2601
    %v2603 = vrot.slane %v2602, 2
    %v2604 = vadd.f32 %v2602, %v2603
    %v2605 = vrot.slane %v2604, 1
    %v2606 = vadd.f32 %v2604, %v2605
    %s2607 = vtos %v2606
    %s2608 = scalar_lea.smem [#allocation7], 0
    %2609 = sst [smem:[%s2608]] %s2607
    // Predicated region
    $region18: #{tpu_custom_call.1} parent=1 // pred_check
      _
    $region19: #{tpu_custom_call.1} parent=1 // pred_check_branch
      %2611 = sbr.rel (0) target = $region21
    $region20: #{tpu_custom_call.1} parent=1 // pred_region
      %s2613 = ssub.s32 16, 16
      %2614 = vsyncadd [#allocation4], %s2613
      %2617 = dma.smem_to_hbm [#allocation7], 16, %s2, [#allocation4]
    $region21: #{tpu_custom_call.1} parent=1 // pred_fallthru
      _
    // Predicated region
    $region22: #{tpu_custom_call.1} parent=1 // pred_check
      _
    $region23: #{tpu_custom_call.1} parent=1 // pred_check_branch
      %2619 = sbr.rel (0) target = $region25
    $region24: #{tpu_custom_call.1} parent=1 // pred_region
      %2620 = dma.done [#allocation4], 16
    $region25: #{tpu_custom_call.1} parent=1 // pred_fallthru
      _
    %2621 = sfence
    %2622 = vsyncpa [#allocation3], 1
    %2623 = vsyncpa [#allocation6], 1
    %2624 = vsyncpa [#allocation4], 1

</llo_original>
